<compile_context>
chip_gen: v7x
topology: tpu7x:2x2x1
jax: 0.10.0
libtpu: 0.0.40
codegen_flags: <defaults>
</compile_context>

<pallas_src>
import functools

import jax
import jax.numpy as jnp
import numpy as np
from jax.experimental import pallas as pl
from jax.experimental.pallas import tpu as pltpu


def _avg_pool_kernel(x_ref, o_ref, *, inv_n):
    # x_ref: (Bt, C, N)   o_ref: (Bt, C)
    x = x_ref[...].astype(jnp.float32)
    # Sum over the spatial (lane) axis, then one cheap (Bt, C) scale by 1/N.
    pooled = jnp.sum(x, axis=-1) * inv_n
    o_ref[...] = pooled.astype(o_ref.dtype)


def _pick_block_b(B, C, N, itemsize, vmem_budget_bytes=8 * 1024 * 1024, max_bt=64):
    """Largest Bt that divides B, fits the (double-buffered) VMEM budget, and
    leaves >= 2 grid steps when B >= 2 (so both v7x TensorCores get work)."""
    per_sample = C * N * itemsize
    cap = max(1, min(max_bt, vmem_budget_bytes // (2 * per_sample)))
    if B >= 2:
        cap = min(cap, max(1, B // 2))
    bt = 1
    for d in range(1, B + 1):
        if B % d == 0 and d <= cap:
            bt = d
    return bt


def pooling_average_pallas(x_nchw):
    """Global average pooling: (B, C, H, W) -> (B, C) (mean over spatial dims)."""
    B, C = x_nchw.shape[0], x_nchw.shape[1]
    # Equivalent of x.view(B, C, H, -1) followed by global pooling: collapse
    # all trailing spatial dims.  This reshape is free (no data movement).
    x_bcn = x_nchw.reshape(B, C, -1)
    N = x_bcn.shape[-1]

    Bt = _pick_block_b(B, C, N, jnp.dtype(x_bcn.dtype).itemsize)
    grid = (B // Bt,)

    out = pl.pallas_call(
        functools.partial(_avg_pool_kernel, inv_n=1.0 / float(N)),
        out_shape=jax.ShapeDtypeStruct((B, C), x_nchw.dtype),
        grid_spec=pltpu.PrefetchScalarGridSpec(
            num_scalar_prefetch=0,
            grid=grid,
            in_specs=[
                # (Bt, C, N): C, N are full array dims -> no (8,128) issues;
                # batch axis blocked to amortize per-step overhead.
                pl.BlockSpec((Bt, C, N), lambda b: (b, 0, 0)),
            ],
            # Lane-dense (Bt, C) output block.
            out_specs=pl.BlockSpec((Bt, C), lambda b: (b, 0)),
        ),
        compiler_params=pltpu.CompilerParams(
            dimension_semantics=("parallel",),
        ),
    )(x_bcn)

    return out  # already (B, C) == torch.flatten(pool_out, 1)


def _reference(x_nchw):
    x = np.asarray(x_nchw)
    B, C = x.shape[0], x.shape[1]
    return x.reshape(B, C, -1).mean(axis=-1)


if __name__ == "__main__":
    # Small shapes consistent with the module (channels lane-dense, like the
    # default input_dim=2048 but scaled down): B=16, C=256, spatial 8x8.
    B, C, H, W = 16, 256, 8, 8

    key = jax.random.PRNGKey(0)
    x = jax.random.normal(key, (B, C, H, W), dtype=jnp.float32)

    out = pooling_average_pallas(x)
    out = jax.block_until_ready(out)

    assert out.shape == (B, C), out.shape

    ref = _reference(x)
    np.testing.assert_allclose(np.asarray(out), ref, rtol=1e-5, atol=1e-5)

    print("KERNEL_OK")
</pallas_src>

<mosaic_0001>
module attributes {stable_mosaic.version = 11 : i64} {
  func.func @_avg_pool_kernel(%arg0: i32, %arg1: memref<8x256x64xf32, #tpu.memory_space<vmem>>, %arg2: memref<8x256xf32, #tpu.memory_space<vmem>>) attributes {dimension_semantics = [#tpu.dimension_semantics<parallel>], iteration_bounds = array<i64: 2>, scalar_prefetch = 0 : i64, scratch_operands = 0 : i64, tpu.core_type = #tpu.core_type<tc>, window_params = [{transform_indices = @transform_0, window_bounds = array<i64: 8, 256, 64>}, {transform_indices = @transform_1, window_bounds = array<i64: 8, 256>}]} {
    %c0 = arith.constant 0 : index
    %c0_0 = arith.constant 0 : index
    %c0_1 = arith.constant 0 : index
    %0 = vector.load %arg1[%c0, %c0_0, %c0_1] : memref<8x256x64xf32, #tpu.memory_space<vmem>>, vector<8x256x64xf32>
    %cst = arith.constant dense<0.000000e+00> : vector<8x256xf32>
    %1 = vector.multi_reduction <add>, %0, %cst [2] : vector<8x256x64xf32> to vector<8x256xf32>
    %cst_2 = arith.constant 1.562500e-02 : f32
    %2 = vector.broadcast %cst_2 : f32 to vector<8x256xf32>
    %3 = arith.mulf %1, %2 : vector<8x256xf32>
    %c0_3 = arith.constant 0 : index
    %c0_4 = arith.constant 0 : index
    %4 = vector.load %arg2[%c0_3, %c0_4] : memref<8x256xf32, #tpu.memory_space<vmem>>, vector<8x256xf32>
    tpu.vector_store %arg2[%c0_3, %c0_4], %3 {strides = array<i32>} : memref<8x256xf32, #tpu.memory_space<vmem>>, vector<8x256xf32>,
    return
  }
  func.func @transform_0(%arg0: i32) -> (i32, i32, i32) {
    %c0_i32 = arith.constant 0 : i32
    %c0_i32_0 = arith.constant 0 : i32
    %c0_i32_1 = arith.constant 0 : i32
    return %arg0, %c0_i32, %c0_i32_0 : i32, i32, i32
  }
  func.func @transform_1(%arg0: i32) -> (i32, i32) {
    %c0_i32 = arith.constant 0 : i32
    %c0_i32_0 = arith.constant 0 : i32
    return %arg0, %c0_i32 : i32, i32
  }
}

</mosaic_0001>

<llo_original>
// kernel: tpu_custom_call.1
$region0: #{tpu_custom_call.1}
  #allocation0 [shape = 'u32[]', space=smem, size = 0x4, offset = 0x4, fixed_abs, tag = 'smem constant byte address 0x4 - core index']
  #allocation1 [shape = 'u32[144,128]{1,0:T(1,128)}', space=vmem, size = 0x12000, scoped, tag = 'internal scratch']
  %s0 = inlined_call_operand.vmem [shape: f32[16,256,64], index: 0, kind: input, shape index: {}]
  %s1 = inlined_call_operand.hbm [shape: f32[16,256], index: 1, kind: output, shape index: {}]
  %s2 = sld [smem:[#allocation0]]
  $region37: #{tpu_custom_call.1} parent=0
    _
  %s4 = ssub.s32 1, %s2
  %s5 = scalar_select 0, %s4, %s2
  $region1: #{tpu_custom_call.1} parent=0
    #allocation2 [shape = 'u8[16384]{0}', space=vmem, size = 0x4000, scoped, tag = 'output window, operand 0']
    #allocation3 [shape = 's32[2]{0}', space=sflag, size = 0x8, scoped, tag = 'scoped memory for tpu_custom_call.1']
    %6 = vsyncpa [#allocation3], 0
    %s7 = scalar_lea.sflag [#allocation3], 1
    %8 = vsyncpa %s7, 0
    loop: start=0, step=1, limit=4
    $region2: #{tpu_custom_call.1} parent=1 // loop_pre_header
      _
    $region3: #{tpu_custom_call.1} parent=1 // loop_header
      %s10 = sphi 0, %s14
      %p11 = scmp.ge.s32.totalorder %s10, 4
      %s20 = sphi 0, %s22
      %s23 = sphi 0, %s20
      %s24 = sphi 0, %s23
      %s40 = sphi 0, %s24
      %s46 = sphi 0, %s48
      %s49 = sphi 0, %s46
      %s50 = sphi 0, %s49
      %s66 = sphi 0, %s50
    $region4: #{tpu_custom_call.1} parent=1 // loop_header_branch
      %13 = sbr.rel (%p11) target = $region8
    $region5: #{tpu_custom_call.1} parent=1 // loop_body
      %s15 = ssub.s32 %s10, 1
      %s16 = ssub.s32 %s10, 2
      %s17 = sadd.s32 %s10, 1
      %s18 = ssub.s32 %s10, %s17
      %p19 = scmp.eq.s32.totalorder %s18, 0
      %s21 = sadd.s32 %s20, 1
      %s22 = scalar_select %p19, %s20, %s21
      %p25 = pneg %p19
      %p26 = scmp.eq.s32.totalorder %s10, 1
      %p27 = por %p25, %p26
      %p28 = scmp.ne.s32.totalorder %s20, %s23
      %p29 = scmp.eq.s32.totalorder %s10, 0
      %p30 = por %p28, %p29
      %p31 = scmp.ne.s32.totalorder %s20, %s23
      %p32 = scmp.eq.s32.totalorder %s15, 1
      %p33 = por %p31, %p32
      %p34 = scmp.ne.s32.totalorder %s23, %s24
      %p35 = scmp.eq.s32.totalorder %s15, 0
      %p36 = por %p34, %p35
      %p37 = scmp.ne.s32.totalorder %s23, %s24
      %p38 = scmp.eq.s32.totalorder %s16, 1
      %p39 = por %p37, %p38
      %p41 = scmp.ne.s32.totalorder %s24, %s40
      %p42 = scmp.eq.s32.totalorder %s16, 0
      %p43 = por %p41, %p42
      %s44 = ssub.s32 %s10, %s17
      %p45 = scmp.eq.s32.totalorder %s44, 0
      %s47 = sadd.s32 %s46, 1
      %s48 = scalar_select %p45, %s46, %s47
      %p51 = pneg %p45
      %p52 = scmp.eq.s32.totalorder %s10, 1
      %p53 = por %p51, %p52
      %p54 = scmp.ne.s32.totalorder %s46, %s49
      %p55 = scmp.eq.s32.totalorder %s10, 0
      %p56 = por %p54, %p55
      %p57 = scmp.ne.s32.totalorder %s46, %s49
      %p58 = scmp.eq.s32.totalorder %s15, 1
      %p59 = por %p57, %p58
      %p60 = scmp.ne.s32.totalorder %s49, %s50
      %p61 = scmp.eq.s32.totalorder %s15, 0
      %p62 = por %p60, %p61
      %p63 = scmp.ne.s32.totalorder %s49, %s50
      %p64 = scmp.eq.s32.totalorder %s16, 1
      %p65 = por %p63, %p64
      %p67 = scmp.ne.s32.totalorder %s50, %s66
      %p68 = scmp.eq.s32.totalorder %s16, 0
      %p69 = por %p67, %p68
      %p70 = scmp.le.s32.totalorder 1, %s10
      %p71 = scmp.lt.s32.totalorder %s10, 3
      %p72 = pnand %p70, %p71
      %p73 = pneg %p72
      // Predicated region
      $region9: #{tpu_custom_call.1} parent=5 // pred_check
        _
      $region10: #{tpu_custom_call.1} parent=5 // pred_check_branch
        %75 = sbr.rel (%p72) target = $region12
      $region11: #{tpu_custom_call.1} parent=5 // pred_region
        %s76 = ssub.s32 %s10, 1
      $region12: #{tpu_custom_call.1} parent=5 // pred_fallthru
        _
      %p77 = scmp.lt.s32.totalorder %s10, 2
      // Predicated region
      $region13: #{tpu_custom_call.1} parent=5 // pred_check
        %p78 = pneg %p77
      $region14: #{tpu_custom_call.1} parent=5 // pred_check_branch
        %80 = sbr.rel (%p78) target = $region16
      $region15: #{tpu_custom_call.1} parent=5 // pred_region
        // Predicated region
        $region17: #{tpu_custom_call.1} parent=15 // pred_check
          %p81 = pneg %p30
        $region18: #{tpu_custom_call.1} parent=15 // pred_check_branch
          %83 = sbr.rel (%p81) target = $region20
        $region19: #{tpu_custom_call.1} parent=15 // pred_region
          %s84 = smul.u32 8, %s10
          %p85 = scmp.lt.s32.totalorder %s84, 15
          %s86 = scalar_select %p85, %s84, 15
          %s87 = smul.addr %s86, 32
          %s88 = smul.addr %s87, 8
          %s89 = scalar_lea.vmem %s0, %s88
          %s90 = smul.u32 8, %s10
        $region20: #{tpu_custom_call.1} parent=15 // pred_fallthru
          _
      $region16: #{tpu_custom_call.1} parent=5 // pred_fallthru
        _
      %p91 = scmp.le.s32.totalorder 1, %s10
      %p92 = scmp.lt.s32.totalorder %s10, 3
      %p93 = pnand %p91, %p92
      %p94 = pneg %p93
      // Predicated region
      $region21: #{tpu_custom_call.1} parent=5 // pred_check
        _
      $region22: #{tpu_custom_call.1} parent=5 // pred_check_branch
        %96 = sbr.rel (%p93) target = $region24
      $region23: #{tpu_custom_call.1} parent=5 // pred_region
        %s97 = ssub.s32 %s10, 1
        %s98 = smul.u32 8, %s15
        %p99 = scmp.lt.s32.totalorder %s98, 15
        %s100 = scalar_select %p99, %s98, 15
        %s101 = smul.addr %s100, 32
        %s102 = smul.addr %s101, 8
        %s103 = scalar_lea.vmem %s0, %s102
        %p104 = pneg %p36
        %p105 = pneg %p33
        %p106 = pneg %p62
        %p107 = pneg %p59
        %s108 = sand.u32 %s49, 1
        %s109 = scalar_lea.sflag [#allocation3], %s108
        %s110 = sand.u32 %s49, 1
        %s111 = smul.addr %s110, 16
        %s112 = scalar_lea.vmem [#allocation2], %s111
        %s113 = smul.u32 8, %s15
        %p114 = scmp.lt.s32.totalorder %s113, 15
        %s115 = scalar_select %p114, %s113, 15
        %s116 = smul.addr %s115, 32
        %s117 = smul.addr %s116, 8
        %s118 = scalar_lea.vmem %s0, %s117
        %s119 = smul.u32 8, %s15
        %v120 = vld [vmem:[%s118] sm:$0xff]
        %v121 = vld [vmem:[%s118 + $0x8] sm:$0xff]
        %v122 = vld [vmem:[%s118 + $0x10] sm:$0xff]
        %v123 = vld [vmem:[%s118 + $0x18] sm:$0xff]
        %v124 = vld [vmem:[%s118 + $0x20] sm:$0xff]
        %v125 = vld [vmem:[%s118 + $0x28] sm:$0xff]
        %v126 = vld [vmem:[%s118 + $0x30] sm:$0xff]
        %v127 = vld [vmem:[%s118 + $0x38] sm:$0xff]
        %v128 = vld [vmem:[%s118 + $0x40] sm:$0xff]
        %v129 = vld [vmem:[%s118 + $0x48] sm:$0xff]
        %v130 = vld [vmem:[%s118 + $0x50] sm:$0xff]
        %v131 = vld [vmem:[%s118 + $0x58] sm:$0xff]
        %v132 = vld [vmem:[%s118 + $0x60] sm:$0xff]
        %v133 = vld [vmem:[%s118 + $0x68] sm:$0xff]
        %v134 = vld [vmem:[%s118 + $0x70] sm:$0xff]
        %v135 = vld [vmem:[%s118 + $0x78] sm:$0xff]
        %v136 = vld [vmem:[%s118 + $0x80] sm:$0xff]
        %v137 = vld [vmem:[%s118 + $0x88] sm:$0xff]
        %v138 = vld [vmem:[%s118 + $0x90] sm:$0xff]
        %v139 = vld [vmem:[%s118 + $0x98] sm:$0xff]
        %v140 = vld [vmem:[%s118 + $0xa0] sm:$0xff]
        %v141 = vld [vmem:[%s118 + $0xa8] sm:$0xff]
        %v142 = vld [vmem:[%s118 + $0xb0] sm:$0xff]
        %v143 = vld [vmem:[%s118 + $0xb8] sm:$0xff]
        %v144 = vld [vmem:[%s118 + $0xc0] sm:$0xff]
        %v145 = vld [vmem:[%s118 + $0xc8] sm:$0xff]
        %v146 = vld [vmem:[%s118 + $0xd0] sm:$0xff]
        %v147 = vld [vmem:[%s118 + $0xd8] sm:$0xff]
        %v148 = vld [vmem:[%s118 + $0xe0] sm:$0xff]
        %v149 = vld [vmem:[%s118 + $0xe8] sm:$0xff]
        %v150 = vld [vmem:[%s118 + $0xf0] sm:$0xff]
        %v151 = vld [vmem:[%s118 + $0xf8] sm:$0xff]
        %v152 = vld [vmem:[%s118 + $0x100] sm:$0xff]
        %v153 = vld [vmem:[%s118 + $0x108] sm:$0xff]
        %v154 = vld [vmem:[%s118 + $0x110] sm:$0xff]
        %v155 = vld [vmem:[%s118 + $0x118] sm:$0xff]
        %v156 = vld [vmem:[%s118 + $0x120] sm:$0xff]
        %v157 = vld [vmem:[%s118 + $0x128] sm:$0xff]
        %v158 = vld [vmem:[%s118 + $0x130] sm:$0xff]
        %v159 = vld [vmem:[%s118 + $0x138] sm:$0xff]
        %v160 = vld [vmem:[%s118 + $0x140] sm:$0xff]
        %v161 = vld [vmem:[%s118 + $0x148] sm:$0xff]
        %v162 = vld [vmem:[%s118 + $0x150] sm:$0xff]
        %v163 = vld [vmem:[%s118 + $0x158] sm:$0xff]
        %v164 = vld [vmem:[%s118 + $0x160] sm:$0xff]
        %v165 = vld [vmem:[%s118 + $0x168] sm:$0xff]
        %v166 = vld [vmem:[%s118 + $0x170] sm:$0xff]
        %v167 = vld [vmem:[%s118 + $0x178] sm:$0xff]
        %v168 = vld [vmem:[%s118 + $0x180] sm:$0xff]
        %v169 = vld [vmem:[%s118 + $0x188] sm:$0xff]
        %v170 = vld [vmem:[%s118 + $0x190] sm:$0xff]
        %v171 = vld [vmem:[%s118 + $0x198] sm:$0xff]
        %v172 = vld [vmem:[%s118 + $0x1a0] sm:$0xff]
        %v173 = vld [vmem:[%s118 + $0x1a8] sm:$0xff]
        %v174 = vld [vmem:[%s118 + $0x1b0] sm:$0xff]
        %v175 = vld [vmem:[%s118 + $0x1b8] sm:$0xff]
        %v176 = vld [vmem:[%s118 + $0x1c0] sm:$0xff]
        %v177 = vld [vmem:[%s118 + $0x1c8] sm:$0xff]
        %v178 = vld [vmem:[%s118 + $0x1d0] sm:$0xff]
        %v179 = vld [vmem:[%s118 + $0x1d8] sm:$0xff]
        %v180 = vld [vmem:[%s118 + $0x1e0] sm:$0xff]
        %v181 = vld [vmem:[%s118 + $0x1e8] sm:$0xff]
        %v182 = vld [vmem:[%s118 + $0x1f0] sm:$0xff]
        %v183 = vld [vmem:[%s118 + $0x1f8] sm:$0xff]
        %v184 = vld [vmem:[%s118 + $0x200] sm:$0xff]
        %v185 = vld [vmem:[%s118 + $0x208] sm:$0xff]
        %v186 = vld [vmem:[%s118 + $0x210] sm:$0xff]
        %v187 = vld [vmem:[%s118 + $0x218] sm:$0xff]
        %v188 = vld [vmem:[%s118 + $0x220] sm:$0xff]
        %v189 = vld [vmem:[%s118 + $0x228] sm:$0xff]
        %v190 = vld [vmem:[%s118 + $0x230] sm:$0xff]
        %v191 = vld [vmem:[%s118 + $0x238] sm:$0xff]
        %v192 = vld [vmem:[%s118 + $0x240] sm:$0xff]
        %v193 = vld [vmem:[%s118 + $0x248] sm:$0xff]
        %v194 = vld [vmem:[%s118 + $0x250] sm:$0xff]
        %v195 = vld [vmem:[%s118 + $0x258] sm:$0xff]
        %v196 = vld [vmem:[%s118 + $0x260] sm:$0xff]
        %v197 = vld [vmem:[%s118 + $0x268] sm:$0xff]
        %v198 = vld [vmem:[%s118 + $0x270] sm:$0xff]
        %v199 = vld [vmem:[%s118 + $0x278] sm:$0xff]
        %v200 = vld [vmem:[%s118 + $0x280] sm:$0xff]
        %v201 = vld [vmem:[%s118 + $0x288] sm:$0xff]
        %v202 = vld [vmem:[%s118 + $0x290] sm:$0xff]
        %v203 = vld [vmem:[%s118 + $0x298] sm:$0xff]
        %v204 = vld [vmem:[%s118 + $0x2a0] sm:$0xff]
        %v205 = vld [vmem:[%s118 + $0x2a8] sm:$0xff]
        %v206 = vld [vmem:[%s118 + $0x2b0] sm:$0xff]
        %v207 = vld [vmem:[%s118 + $0x2b8] sm:$0xff]
        %v208 = vld [vmem:[%s118 + $0x2c0] sm:$0xff]
        %v209 = vld [vmem:[%s118 + $0x2c8] sm:$0xff]
        %v210 = vld [vmem:[%s118 + $0x2d0] sm:$0xff]
        %v211 = vld [vmem:[%s118 + $0x2d8] sm:$0xff]
        %v212 = vld [vmem:[%s118 + $0x2e0] sm:$0xff]
        %v213 = vld [vmem:[%s118 + $0x2e8] sm:$0xff]
        %v214 = vld [vmem:[%s118 + $0x2f0] sm:$0xff]
        %v215 = vld [vmem:[%s118 + $0x2f8] sm:$0xff]
        %v216 = vld [vmem:[%s118 + $0x300] sm:$0xff]
        %v217 = vld [vmem:[%s118 + $0x308] sm:$0xff]
        %v218 = vld [vmem:[%s118 + $0x310] sm:$0xff]
        %v219 = vld [vmem:[%s118 + $0x318] sm:$0xff]
        %v220 = vld [vmem:[%s118 + $0x320] sm:$0xff]
        %v221 = vld [vmem:[%s118 + $0x328] sm:$0xff]
        %v222 = vld [vmem:[%s118 + $0x330] sm:$0xff]
        %v223 = vld [vmem:[%s118 + $0x338] sm:$0xff]
        %v224 = vld [vmem:[%s118 + $0x340] sm:$0xff]
        %v225 = vld [vmem:[%s118 + $0x348] sm:$0xff]
        %v226 = vld [vmem:[%s118 + $0x350] sm:$0xff]
        %v227 = vld [vmem:[%s118 + $0x358] sm:$0xff]
        %v228 = vld [vmem:[%s118 + $0x360] sm:$0xff]
        %v229 = vld [vmem:[%s118 + $0x368] sm:$0xff]
        %v230 = vld [vmem:[%s118 + $0x370] sm:$0xff]
        %v231 = vld [vmem:[%s118 + $0x378] sm:$0xff]
        %v232 = vld [vmem:[%s118 + $0x380] sm:$0xff]
        %v233 = vld [vmem:[%s118 + $0x388] sm:$0xff]
        %v234 = vld [vmem:[%s118 + $0x390] sm:$0xff]
        %v235 = vld [vmem:[%s118 + $0x398] sm:$0xff]
        %v236 = vld [vmem:[%s118 + $0x3a0] sm:$0xff]
        %v237 = vld [vmem:[%s118 + $0x3a8] sm:$0xff]
        %v238 = vld [vmem:[%s118 + $0x3b0] sm:$0xff]
        %v239 = vld [vmem:[%s118 + $0x3b8] sm:$0xff]
        %v240 = vld [vmem:[%s118 + $0x3c0] sm:$0xff]
        %v241 = vld [vmem:[%s118 + $0x3c8] sm:$0xff]
        %v242 = vld [vmem:[%s118 + $0x3d0] sm:$0xff]
        %v243 = vld [vmem:[%s118 + $0x3d8] sm:$0xff]
        %v244 = vld [vmem:[%s118 + $0x3e0] sm:$0xff]
        %v245 = vld [vmem:[%s118 + $0x3e8] sm:$0xff]
        %v246 = vld [vmem:[%s118 + $0x3f0] sm:$0xff]
        %v247 = vld [vmem:[%s118 + $0x3f8] sm:$0xff]
        %v248 = vld [vmem:[%s118 + $0x400] sm:$0xff]
        %v249 = vld [vmem:[%s118 + $0x408] sm:$0xff]
        %v250 = vld [vmem:[%s118 + $0x410] sm:$0xff]
        %v251 = vld [vmem:[%s118 + $0x418] sm:$0xff]
        %v252 = vld [vmem:[%s118 + $0x420] sm:$0xff]
        %v253 = vld [vmem:[%s118 + $0x428] sm:$0xff]
        %v254 = vld [vmem:[%s118 + $0x430] sm:$0xff]
        %v255 = vld [vmem:[%s118 + $0x438] sm:$0xff]
        %v256 = vld [vmem:[%s118 + $0x440] sm:$0xff]
        %v257 = vld [vmem:[%s118 + $0x448] sm:$0xff]
        %v258 = vld [vmem:[%s118 + $0x450] sm:$0xff]
        %v259 = vld [vmem:[%s118 + $0x458] sm:$0xff]
        %v260 = vld [vmem:[%s118 + $0x460] sm:$0xff]
        %v261 = vld [vmem:[%s118 + $0x468] sm:$0xff]
        %v262 = vld [vmem:[%s118 + $0x470] sm:$0xff]
        %v263 = vld [vmem:[%s118 + $0x478] sm:$0xff]
        %v264 = vld [vmem:[%s118 + $0x480] sm:$0xff]
        %v265 = vld [vmem:[%s118 + $0x488] sm:$0xff]
        %v266 = vld [vmem:[%s118 + $0x490] sm:$0xff]
        %v267 = vld [vmem:[%s118 + $0x498] sm:$0xff]
        %v268 = vld [vmem:[%s118 + $0x4a0] sm:$0xff]
        %v269 = vld [vmem:[%s118 + $0x4a8] sm:$0xff]
        %v270 = vld [vmem:[%s118 + $0x4b0] sm:$0xff]
        %v271 = vld [vmem:[%s118 + $0x4b8] sm:$0xff]
        %v272 = vld [vmem:[%s118 + $0x4c0] sm:$0xff]
        %v273 = vld [vmem:[%s118 + $0x4c8] sm:$0xff]
        %v274 = vld [vmem:[%s118 + $0x4d0] sm:$0xff]
        %v275 = vld [vmem:[%s118 + $0x4d8] sm:$0xff]
        %v276 = vld [vmem:[%s118 + $0x4e0] sm:$0xff]
        %v277 = vld [vmem:[%s118 + $0x4e8] sm:$0xff]
        %v278 = vld [vmem:[%s118 + $0x4f0] sm:$0xff]
        %v279 = vld [vmem:[%s118 + $0x4f8] sm:$0xff]
        %v280 = vld [vmem:[%s118 + $0x500] sm:$0xff]
        %v281 = vld [vmem:[%s118 + $0x508] sm:$0xff]
        %v282 = vld [vmem:[%s118 + $0x510] sm:$0xff]
        %v283 = vld [vmem:[%s118 + $0x518] sm:$0xff]
        %v284 = vld [vmem:[%s118 + $0x520] sm:$0xff]
        %v285 = vld [vmem:[%s118 + $0x528] sm:$0xff]
        %v286 = vld [vmem:[%s118 + $0x530] sm:$0xff]
        %v287 = vld [vmem:[%s118 + $0x538] sm:$0xff]
        %v288 = vld [vmem:[%s118 + $0x540] sm:$0xff]
        %v289 = vld [vmem:[%s118 + $0x548] sm:$0xff]
        %v290 = vld [vmem:[%s118 + $0x550] sm:$0xff]
        %v291 = vld [vmem:[%s118 + $0x558] sm:$0xff]
        %v292 = vld [vmem:[%s118 + $0x560] sm:$0xff]
        %v293 = vld [vmem:[%s118 + $0x568] sm:$0xff]
        %v294 = vld [vmem:[%s118 + $0x570] sm:$0xff]
        %v295 = vld [vmem:[%s118 + $0x578] sm:$0xff]
        %v296 = vld [vmem:[%s118 + $0x580] sm:$0xff]
        %v297 = vld [vmem:[%s118 + $0x588] sm:$0xff]
        %v298 = vld [vmem:[%s118 + $0x590] sm:$0xff]
        %v299 = vld [vmem:[%s118 + $0x598] sm:$0xff]
        %v300 = vld [vmem:[%s118 + $0x5a0] sm:$0xff]
        %v301 = vld [vmem:[%s118 + $0x5a8] sm:$0xff]
        %v302 = vld [vmem:[%s118 + $0x5b0] sm:$0xff]
        %v303 = vld [vmem:[%s118 + $0x5b8] sm:$0xff]
        %v304 = vld [vmem:[%s118 + $0x5c0] sm:$0xff]
        %v305 = vld [vmem:[%s118 + $0x5c8] sm:$0xff]
        %v306 = vld [vmem:[%s118 + $0x5d0] sm:$0xff]
        %v307 = vld [vmem:[%s118 + $0x5d8] sm:$0xff]
        %v308 = vld [vmem:[%s118 + $0x5e0] sm:$0xff]
        %v309 = vld [vmem:[%s118 + $0x5e8] sm:$0xff]
        %v310 = vld [vmem:[%s118 + $0x5f0] sm:$0xff]
        %v311 = vld [vmem:[%s118 + $0x5f8] sm:$0xff]
        %v312 = vld [vmem:[%s118 + $0x600] sm:$0xff]
        %v313 = vld [vmem:[%s118 + $0x608] sm:$0xff]
        %v314 = vld [vmem:[%s118 + $0x610] sm:$0xff]
        %v315 = vld [vmem:[%s118 + $0x618] sm:$0xff]
        %v316 = vld [vmem:[%s118 + $0x620] sm:$0xff]
        %v317 = vld [vmem:[%s118 + $0x628] sm:$0xff]
        %v318 = vld [vmem:[%s118 + $0x630] sm:$0xff]
        %v319 = vld [vmem:[%s118 + $0x638] sm:$0xff]
        %v320 = vld [vmem:[%s118 + $0x640] sm:$0xff]
        %v321 = vld [vmem:[%s118 + $0x648] sm:$0xff]
        %v322 = vld [vmem:[%s118 + $0x650] sm:$0xff]
        %v323 = vld [vmem:[%s118 + $0x658] sm:$0xff]
        %v324 = vld [vmem:[%s118 + $0x660] sm:$0xff]
        %v325 = vld [vmem:[%s118 + $0x668] sm:$0xff]
        %v326 = vld [vmem:[%s118 + $0x670] sm:$0xff]
        %v327 = vld [vmem:[%s118 + $0x678] sm:$0xff]
        %v328 = vld [vmem:[%s118 + $0x680] sm:$0xff]
        %v329 = vld [vmem:[%s118 + $0x688] sm:$0xff]
        %v330 = vld [vmem:[%s118 + $0x690] sm:$0xff]
        %v331 = vld [vmem:[%s118 + $0x698] sm:$0xff]
        %v332 = vld [vmem:[%s118 + $0x6a0] sm:$0xff]
        %v333 = vld [vmem:[%s118 + $0x6a8] sm:$0xff]
        %v334 = vld [vmem:[%s118 + $0x6b0] sm:$0xff]
        %v335 = vld [vmem:[%s118 + $0x6b8] sm:$0xff]
        %v336 = vld [vmem:[%s118 + $0x6c0] sm:$0xff]
        %v337 = vld [vmem:[%s118 + $0x6c8] sm:$0xff]
        %v338 = vld [vmem:[%s118 + $0x6d0] sm:$0xff]
        %v339 = vld [vmem:[%s118 + $0x6d8] sm:$0xff]
        %v340 = vld [vmem:[%s118 + $0x6e0] sm:$0xff]
        %v341 = vld [vmem:[%s118 + $0x6e8] sm:$0xff]
        %v342 = vld [vmem:[%s118 + $0x6f0] sm:$0xff]
        %v343 = vld [vmem:[%s118 + $0x6f8] sm:$0xff]
        %v344 = vld [vmem:[%s118 + $0x700] sm:$0xff]
        %v345 = vld [vmem:[%s118 + $0x708] sm:$0xff]
        %v346 = vld [vmem:[%s118 + $0x710] sm:$0xff]
        %v347 = vld [vmem:[%s118 + $0x718] sm:$0xff]
        %v348 = vld [vmem:[%s118 + $0x720] sm:$0xff]
        %v349 = vld [vmem:[%s118 + $0x728] sm:$0xff]
        %v350 = vld [vmem:[%s118 + $0x730] sm:$0xff]
        %v351 = vld [vmem:[%s118 + $0x738] sm:$0xff]
        %v352 = vld [vmem:[%s118 + $0x740] sm:$0xff]
        %v353 = vld [vmem:[%s118 + $0x748] sm:$0xff]
        %v354 = vld [vmem:[%s118 + $0x750] sm:$0xff]
        %v355 = vld [vmem:[%s118 + $0x758] sm:$0xff]
        %v356 = vld [vmem:[%s118 + $0x760] sm:$0xff]
        %v357 = vld [vmem:[%s118 + $0x768] sm:$0xff]
        %v358 = vld [vmem:[%s118 + $0x770] sm:$0xff]
        %v359 = vld [vmem:[%s118 + $0x778] sm:$0xff]
        %v360 = vld [vmem:[%s118 + $0x780] sm:$0xff]
        %v361 = vld [vmem:[%s118 + $0x788] sm:$0xff]
        %v362 = vld [vmem:[%s118 + $0x790] sm:$0xff]
        %v363 = vld [vmem:[%s118 + $0x798] sm:$0xff]
        %v364 = vld [vmem:[%s118 + $0x7a0] sm:$0xff]
        %v365 = vld [vmem:[%s118 + $0x7a8] sm:$0xff]
        %v366 = vld [vmem:[%s118 + $0x7b0] sm:$0xff]
        %v367 = vld [vmem:[%s118 + $0x7b8] sm:$0xff]
        %v368 = vld [vmem:[%s118 + $0x7c0] sm:$0xff]
        %v369 = vld [vmem:[%s118 + $0x7c8] sm:$0xff]
        %v370 = vld [vmem:[%s118 + $0x7d0] sm:$0xff]
        %v371 = vld [vmem:[%s118 + $0x7d8] sm:$0xff]
        %v372 = vld [vmem:[%s118 + $0x7e0] sm:$0xff]
        %v373 = vld [vmem:[%s118 + $0x7e8] sm:$0xff]
        %v374 = vld [vmem:[%s118 + $0x7f0] sm:$0xff]
        %v375 = vld [vmem:[%s118 + $0x7f8] sm:$0xff]
        %vm376 = vcmask 523264
        %v377 = vsel %vm376, %v120, 0.0
        %378 = vadd.xlane.f32.xlu0 %v377
        %v379 = vpop.xlane.xlu0 %378
        %v380 = vsel %vm376, %v121, 0.0
        %381 = vadd.xlane.f32.xlu0 %v380
        %v382 = vpop.xlane.xlu0 %381
        %v383 = vsel %vm376, %v122, 0.0
        %384 = vadd.xlane.f32.xlu0 %v383
        %v385 = vpop.xlane.xlu0 %384
        %v386 = vsel %vm376, %v123, 0.0
        %387 = vadd.xlane.f32.xlu0 %v386
        %v388 = vpop.xlane.xlu0 %387
        %v389 = vsel %vm376, %v124, 0.0
        %390 = vadd.xlane.f32.xlu0 %v389
        %v391 = vpop.xlane.xlu0 %390
        %v392 = vsel %vm376, %v125, 0.0
        %393 = vadd.xlane.f32.xlu0 %v392
        %v394 = vpop.xlane.xlu0 %393
        %v395 = vsel %vm376, %v126, 0.0
        %396 = vadd.xlane.f32.xlu0 %v395
        %v397 = vpop.xlane.xlu0 %396
        %v398 = vsel %vm376, %v127, 0.0
        %399 = vadd.xlane.f32.xlu0 %v398
        %v400 = vpop.xlane.xlu0 %399
        %v401 = vsel %vm376, %v128, 0.0
        %402 = vadd.xlane.f32.xlu0 %v401
        %v403 = vpop.xlane.xlu0 %402
        %v404 = vsel %vm376, %v129, 0.0
        %405 = vadd.xlane.f32.xlu0 %v404
        %v406 = vpop.xlane.xlu0 %405
        %v407 = vsel %vm376, %v130, 0.0
        %408 = vadd.xlane.f32.xlu0 %v407
        %v409 = vpop.xlane.xlu0 %408
        %v410 = vsel %vm376, %v131, 0.0
        %411 = vadd.xlane.f32.xlu0 %v410
        %v412 = vpop.xlane.xlu0 %411
        %v413 = vsel %vm376, %v132, 0.0
        %414 = vadd.xlane.f32.xlu0 %v413
        %v415 = vpop.xlane.xlu0 %414
        %v416 = vsel %vm376, %v133, 0.0
        %417 = vadd.xlane.f32.xlu0 %v416
        %v418 = vpop.xlane.xlu0 %417
        %v419 = vsel %vm376, %v134, 0.0
        %420 = vadd.xlane.f32.xlu0 %v419
        %v421 = vpop.xlane.xlu0 %420
        %v422 = vsel %vm376, %v135, 0.0
        %423 = vadd.xlane.f32.xlu0 %v422
        %v424 = vpop.xlane.xlu0 %423
        %v425 = vsel %vm376, %v136, 0.0
        %426 = vadd.xlane.f32.xlu0 %v425
        %v427 = vpop.xlane.xlu0 %426
        %v428 = vsel %vm376, %v137, 0.0
        %429 = vadd.xlane.f32.xlu0 %v428
        %v430 = vpop.xlane.xlu0 %429
        %v431 = vsel %vm376, %v138, 0.0
        %432 = vadd.xlane.f32.xlu0 %v431
        %v433 = vpop.xlane.xlu0 %432
        %v434 = vsel %vm376, %v139, 0.0
        %435 = vadd.xlane.f32.xlu0 %v434
        %v436 = vpop.xlane.xlu0 %435
        %v437 = vsel %vm376, %v140, 0.0
        %438 = vadd.xlane.f32.xlu0 %v437
        %v439 = vpop.xlane.xlu0 %438
        %v440 = vsel %vm376, %v141, 0.0
        %441 = vadd.xlane.f32.xlu0 %v440
        %v442 = vpop.xlane.xlu0 %441
        %v443 = vsel %vm376, %v142, 0.0
        %444 = vadd.xlane.f32.xlu0 %v443
        %v445 = vpop.xlane.xlu0 %444
        %v446 = vsel %vm376, %v143, 0.0
        %447 = vadd.xlane.f32.xlu0 %v446
        %v448 = vpop.xlane.xlu0 %447
        %v449 = vsel %vm376, %v144, 0.0
        %450 = vadd.xlane.f32.xlu0 %v449
        %v451 = vpop.xlane.xlu0 %450
        %v452 = vsel %vm376, %v145, 0.0
        %453 = vadd.xlane.f32.xlu0 %v452
        %v454 = vpop.xlane.xlu0 %453
        %v455 = vsel %vm376, %v146, 0.0
        %456 = vadd.xlane.f32.xlu0 %v455
        %v457 = vpop.xlane.xlu0 %456
        %v458 = vsel %vm376, %v147, 0.0
        %459 = vadd.xlane.f32.xlu0 %v458
        %v460 = vpop.xlane.xlu0 %459
        %v461 = vsel %vm376, %v148, 0.0
        %462 = vadd.xlane.f32.xlu0 %v461
        %v463 = vpop.xlane.xlu0 %462
        %v464 = vsel %vm376, %v149, 0.0
        %465 = vadd.xlane.f32.xlu0 %v464
        %v466 = vpop.xlane.xlu0 %465
        %v467 = vsel %vm376, %v150, 0.0
        %468 = vadd.xlane.f32.xlu0 %v467
        %v469 = vpop.xlane.xlu0 %468
        %v470 = vsel %vm376, %v151, 0.0
        %471 = vadd.xlane.f32.xlu0 %v470
        %v472 = vpop.xlane.xlu0 %471
        %v473 = vsel %vm376, %v152, 0.0
        %474 = vadd.xlane.f32.xlu0 %v473
        %v475 = vpop.xlane.xlu0 %474
        %v476 = vsel %vm376, %v153, 0.0
        %477 = vadd.xlane.f32.xlu0 %v476
        %v478 = vpop.xlane.xlu0 %477
        %v479 = vsel %vm376, %v154, 0.0
        %480 = vadd.xlane.f32.xlu0 %v479
        %v481 = vpop.xlane.xlu0 %480
        %v482 = vsel %vm376, %v155, 0.0
        %483 = vadd.xlane.f32.xlu0 %v482
        %v484 = vpop.xlane.xlu0 %483
        %v485 = vsel %vm376, %v156, 0.0
        %486 = vadd.xlane.f32.xlu0 %v485
        %v487 = vpop.xlane.xlu0 %486
        %v488 = vsel %vm376, %v157, 0.0
        %489 = vadd.xlane.f32.xlu0 %v488
        %v490 = vpop.xlane.xlu0 %489
        %v491 = vsel %vm376, %v158, 0.0
        %492 = vadd.xlane.f32.xlu0 %v491
        %v493 = vpop.xlane.xlu0 %492
        %v494 = vsel %vm376, %v159, 0.0
        %495 = vadd.xlane.f32.xlu0 %v494
        %v496 = vpop.xlane.xlu0 %495
        %v497 = vsel %vm376, %v160, 0.0
        %498 = vadd.xlane.f32.xlu0 %v497
        %v499 = vpop.xlane.xlu0 %498
        %v500 = vsel %vm376, %v161, 0.0
        %501 = vadd.xlane.f32.xlu0 %v500
        %v502 = vpop.xlane.xlu0 %501
        %v503 = vsel %vm376, %v162, 0.0
        %504 = vadd.xlane.f32.xlu0 %v503
        %v505 = vpop.xlane.xlu0 %504
        %v506 = vsel %vm376, %v163, 0.0
        %507 = vadd.xlane.f32.xlu0 %v506
        %v508 = vpop.xlane.xlu0 %507
        %v509 = vsel %vm376, %v164, 0.0
        %510 = vadd.xlane.f32.xlu0 %v509
        %v511 = vpop.xlane.xlu0 %510
        %v512 = vsel %vm376, %v165, 0.0
        %513 = vadd.xlane.f32.xlu0 %v512
        %v514 = vpop.xlane.xlu0 %513
        %v515 = vsel %vm376, %v166, 0.0
        %516 = vadd.xlane.f32.xlu0 %v515
        %v517 = vpop.xlane.xlu0 %516
        %v518 = vsel %vm376, %v167, 0.0
        %519 = vadd.xlane.f32.xlu0 %v518
        %v520 = vpop.xlane.xlu0 %519
        %v521 = vsel %vm376, %v168, 0.0
        %522 = vadd.xlane.f32.xlu0 %v521
        %v523 = vpop.xlane.xlu0 %522
        %v524 = vsel %vm376, %v169, 0.0
        %525 = vadd.xlane.f32.xlu0 %v524
        %v526 = vpop.xlane.xlu0 %525
        %v527 = vsel %vm376, %v170, 0.0
        %528 = vadd.xlane.f32.xlu0 %v527
        %v529 = vpop.xlane.xlu0 %528
        %v530 = vsel %vm376, %v171, 0.0
        %531 = vadd.xlane.f32.xlu0 %v530
        %v532 = vpop.xlane.xlu0 %531
        %v533 = vsel %vm376, %v172, 0.0
        %534 = vadd.xlane.f32.xlu0 %v533
        %v535 = vpop.xlane.xlu0 %534
        %v536 = vsel %vm376, %v173, 0.0
        %537 = vadd.xlane.f32.xlu0 %v536
        %v538 = vpop.xlane.xlu0 %537
        %v539 = vsel %vm376, %v174, 0.0
        %540 = vadd.xlane.f32.xlu0 %v539
        %v541 = vpop.xlane.xlu0 %540
        %v542 = vsel %vm376, %v175, 0.0
        %543 = vadd.xlane.f32.xlu0 %v542
        %v544 = vpop.xlane.xlu0 %543
        %v545 = vsel %vm376, %v176, 0.0
        %546 = vadd.xlane.f32.xlu0 %v545
        %v547 = vpop.xlane.xlu0 %546
        %v548 = vsel %vm376, %v177, 0.0
        %549 = vadd.xlane.f32.xlu0 %v548
        %v550 = vpop.xlane.xlu0 %549
        %v551 = vsel %vm376, %v178, 0.0
        %552 = vadd.xlane.f32.xlu0 %v551
        %v553 = vpop.xlane.xlu0 %552
        %v554 = vsel %vm376, %v179, 0.0
        %555 = vadd.xlane.f32.xlu0 %v554
        %v556 = vpop.xlane.xlu0 %555
        %v557 = vsel %vm376, %v180, 0.0
        %558 = vadd.xlane.f32.xlu0 %v557
        %v559 = vpop.xlane.xlu0 %558
        %v560 = vsel %vm376, %v181, 0.0
        %561 = vadd.xlane.f32.xlu0 %v560
        %v562 = vpop.xlane.xlu0 %561
        %v563 = vsel %vm376, %v182, 0.0
        %564 = vadd.xlane.f32.xlu0 %v563
        %v565 = vpop.xlane.xlu0 %564
        %v566 = vsel %vm376, %v183, 0.0
        %567 = vadd.xlane.f32.xlu0 %v566
        %v568 = vpop.xlane.xlu0 %567
        %v569 = vsel %vm376, %v184, 0.0
        %570 = vadd.xlane.f32.xlu0 %v569
        %v571 = vpop.xlane.xlu0 %570
        %v572 = vsel %vm376, %v185, 0.0
        %573 = vadd.xlane.f32.xlu0 %v572
        %v574 = vpop.xlane.xlu0 %573
        %v575 = vsel %vm376, %v186, 0.0
        %576 = vadd.xlane.f32.xlu0 %v575
        %v577 = vpop.xlane.xlu0 %576
        %v578 = vsel %vm376, %v187, 0.0
        %579 = vadd.xlane.f32.xlu0 %v578
        %v580 = vpop.xlane.xlu0 %579
        %v581 = vsel %vm376, %v188, 0.0
        %582 = vadd.xlane.f32.xlu0 %v581
        %v583 = vpop.xlane.xlu0 %582
        %v584 = vsel %vm376, %v189, 0.0
        %585 = vadd.xlane.f32.xlu0 %v584
        %v586 = vpop.xlane.xlu0 %585
        %v587 = vsel %vm376, %v190, 0.0
        %588 = vadd.xlane.f32.xlu0 %v587
        %v589 = vpop.xlane.xlu0 %588
        %v590 = vsel %vm376, %v191, 0.0
        %591 = vadd.xlane.f32.xlu0 %v590
        %v592 = vpop.xlane.xlu0 %591
        %v593 = vsel %vm376, %v192, 0.0
        %594 = vadd.xlane.f32.xlu0 %v593
        %v595 = vpop.xlane.xlu0 %594
        %v596 = vsel %vm376, %v193, 0.0
        %597 = vadd.xlane.f32.xlu0 %v596
        %v598 = vpop.xlane.xlu0 %597
        %v599 = vsel %vm376, %v194, 0.0
        %600 = vadd.xlane.f32.xlu0 %v599
        %v601 = vpop.xlane.xlu0 %600
        %v602 = vsel %vm376, %v195, 0.0
        %603 = vadd.xlane.f32.xlu0 %v602
        %v604 = vpop.xlane.xlu0 %603
        %v605 = vsel %vm376, %v196, 0.0
        %606 = vadd.xlane.f32.xlu0 %v605
        %v607 = vpop.xlane.xlu0 %606
        %v608 = vsel %vm376, %v197, 0.0
        %609 = vadd.xlane.f32.xlu0 %v608
        %v610 = vpop.xlane.xlu0 %609
        %v611 = vsel %vm376, %v198, 0.0
        %612 = vadd.xlane.f32.xlu0 %v611
        %v613 = vpop.xlane.xlu0 %612
        %v614 = vsel %vm376, %v199, 0.0
        %615 = vadd.xlane.f32.xlu0 %v614
        %v616 = vpop.xlane.xlu0 %615
        %v617 = vsel %vm376, %v200, 0.0
        %618 = vadd.xlane.f32.xlu0 %v617
        %v619 = vpop.xlane.xlu0 %618
        %v620 = vsel %vm376, %v201, 0.0
        %621 = vadd.xlane.f32.xlu0 %v620
        %v622 = vpop.xlane.xlu0 %621
        %v623 = vsel %vm376, %v202, 0.0
        %624 = vadd.xlane.f32.xlu0 %v623
        %v625 = vpop.xlane.xlu0 %624
        %v626 = vsel %vm376, %v203, 0.0
        %627 = vadd.xlane.f32.xlu0 %v626
        %v628 = vpop.xlane.xlu0 %627
        %v629 = vsel %vm376, %v204, 0.0
        %630 = vadd.xlane.f32.xlu0 %v629
        %v631 = vpop.xlane.xlu0 %630
        %v632 = vsel %vm376, %v205, 0.0
        %633 = vadd.xlane.f32.xlu0 %v632
        %v634 = vpop.xlane.xlu0 %633
        %v635 = vsel %vm376, %v206, 0.0
        %636 = vadd.xlane.f32.xlu0 %v635
        %v637 = vpop.xlane.xlu0 %636
        %v638 = vsel %vm376, %v207, 0.0
        %639 = vadd.xlane.f32.xlu0 %v638
        %v640 = vpop.xlane.xlu0 %639
        %v641 = vsel %vm376, %v208, 0.0
        %642 = vadd.xlane.f32.xlu0 %v641
        %v643 = vpop.xlane.xlu0 %642
        %v644 = vsel %vm376, %v209, 0.0
        %645 = vadd.xlane.f32.xlu0 %v644
        %v646 = vpop.xlane.xlu0 %645
        %v647 = vsel %vm376, %v210, 0.0
        %648 = vadd.xlane.f32.xlu0 %v647
        %v649 = vpop.xlane.xlu0 %648
        %v650 = vsel %vm376, %v211, 0.0
        %651 = vadd.xlane.f32.xlu0 %v650
        %v652 = vpop.xlane.xlu0 %651
        %v653 = vsel %vm376, %v212, 0.0
        %654 = vadd.xlane.f32.xlu0 %v653
        %v655 = vpop.xlane.xlu0 %654
        %v656 = vsel %vm376, %v213, 0.0
        %657 = vadd.xlane.f32.xlu0 %v656
        %v658 = vpop.xlane.xlu0 %657
        %v659 = vsel %vm376, %v214, 0.0
        %660 = vadd.xlane.f32.xlu0 %v659
        %v661 = vpop.xlane.xlu0 %660
        %v662 = vsel %vm376, %v215, 0.0
        %663 = vadd.xlane.f32.xlu0 %v662
        %v664 = vpop.xlane.xlu0 %663
        %v665 = vsel %vm376, %v216, 0.0
        %666 = vadd.xlane.f32.xlu0 %v665
        %v667 = vpop.xlane.xlu0 %666
        %v668 = vsel %vm376, %v217, 0.0
        %669 = vadd.xlane.f32.xlu0 %v668
        %v670 = vpop.xlane.xlu0 %669
        %v671 = vsel %vm376, %v218, 0.0
        %672 = vadd.xlane.f32.xlu0 %v671
        %v673 = vpop.xlane.xlu0 %672
        %v674 = vsel %vm376, %v219, 0.0
        %675 = vadd.xlane.f32.xlu0 %v674
        %v676 = vpop.xlane.xlu0 %675
        %v677 = vsel %vm376, %v220, 0.0
        %678 = vadd.xlane.f32.xlu0 %v677
        %v679 = vpop.xlane.xlu0 %678
        %v680 = vsel %vm376, %v221, 0.0
        %681 = vadd.xlane.f32.xlu0 %v680
        %v682 = vpop.xlane.xlu0 %681
        %v683 = vsel %vm376, %v222, 0.0
        %684 = vadd.xlane.f32.xlu0 %v683
        %v685 = vpop.xlane.xlu0 %684
        %v686 = vsel %vm376, %v223, 0.0
        %687 = vadd.xlane.f32.xlu0 %v686
        %v688 = vpop.xlane.xlu0 %687
        %v689 = vsel %vm376, %v224, 0.0
        %690 = vadd.xlane.f32.xlu0 %v689
        %v691 = vpop.xlane.xlu0 %690
        %v692 = vsel %vm376, %v225, 0.0
        %693 = vadd.xlane.f32.xlu0 %v692
        %v694 = vpop.xlane.xlu0 %693
        %v695 = vsel %vm376, %v226, 0.0
        %696 = vadd.xlane.f32.xlu0 %v695
        %v697 = vpop.xlane.xlu0 %696
        %v698 = vsel %vm376, %v227, 0.0
        %699 = vadd.xlane.f32.xlu0 %v698
        %v700 = vpop.xlane.xlu0 %699
        %v701 = vsel %vm376, %v228, 0.0
        %702 = vadd.xlane.f32.xlu0 %v701
        %v703 = vpop.xlane.xlu0 %702
        %v704 = vsel %vm376, %v229, 0.0
        %705 = vadd.xlane.f32.xlu0 %v704
        %v706 = vpop.xlane.xlu0 %705
        %v707 = vsel %vm376, %v230, 0.0
        %708 = vadd.xlane.f32.xlu0 %v707
        %v709 = vpop.xlane.xlu0 %708
        %v710 = vsel %vm376, %v231, 0.0
        %711 = vadd.xlane.f32.xlu0 %v710
        %v712 = vpop.xlane.xlu0 %711
        %v713 = vsel %vm376, %v232, 0.0
        %714 = vadd.xlane.f32.xlu0 %v713
        %v715 = vpop.xlane.xlu0 %714
        %v716 = vsel %vm376, %v233, 0.0
        %717 = vadd.xlane.f32.xlu0 %v716
        %v718 = vpop.xlane.xlu0 %717
        %v719 = vsel %vm376, %v234, 0.0
        %720 = vadd.xlane.f32.xlu0 %v719
        %v721 = vpop.xlane.xlu0 %720
        %v722 = vsel %vm376, %v235, 0.0
        %723 = vadd.xlane.f32.xlu0 %v722
        %v724 = vpop.xlane.xlu0 %723
        %v725 = vsel %vm376, %v236, 0.0
        %726 = vadd.xlane.f32.xlu0 %v725
        %v727 = vpop.xlane.xlu0 %726
        %v728 = vsel %vm376, %v237, 0.0
        %729 = vadd.xlane.f32.xlu0 %v728
        %v730 = vpop.xlane.xlu0 %729
        %v731 = vsel %vm376, %v238, 0.0
        %732 = vadd.xlane.f32.xlu0 %v731
        %v733 = vpop.xlane.xlu0 %732
        %v734 = vsel %vm376, %v239, 0.0
        %735 = vadd.xlane.f32.xlu0 %v734
        %v736 = vpop.xlane.xlu0 %735
        %v737 = vsel %vm376, %v240, 0.0
        %738 = vadd.xlane.f32.xlu0 %v737
        %v739 = vpop.xlane.xlu0 %738
        %v740 = vsel %vm376, %v241, 0.0
        %741 = vadd.xlane.f32.xlu0 %v740
        %v742 = vpop.xlane.xlu0 %741
        %v743 = vsel %vm376, %v242, 0.0
        %744 = vadd.xlane.f32.xlu0 %v743
        %v745 = vpop.xlane.xlu0 %744
        %v746 = vsel %vm376, %v243, 0.0
        %747 = vadd.xlane.f32.xlu0 %v746
        %v748 = vpop.xlane.xlu0 %747
        %v749 = vsel %vm376, %v244, 0.0
        %750 = vadd.xlane.f32.xlu0 %v749
        %v751 = vpop.xlane.xlu0 %750
        %v752 = vsel %vm376, %v245, 0.0
        %753 = vadd.xlane.f32.xlu0 %v752
        %v754 = vpop.xlane.xlu0 %753
        %v755 = vsel %vm376, %v246, 0.0
        %756 = vadd.xlane.f32.xlu0 %v755
        %v757 = vpop.xlane.xlu0 %756
        %v758 = vsel %vm376, %v247, 0.0
        %759 = vadd.xlane.f32.xlu0 %v758
        %v760 = vpop.xlane.xlu0 %759
        %v761 = vsel %vm376, %v248, 0.0
        %762 = vadd.xlane.f32.xlu0 %v761
        %v763 = vpop.xlane.xlu0 %762
        %v764 = vsel %vm376, %v249, 0.0
        %765 = vadd.xlane.f32.xlu0 %v764
        %v766 = vpop.xlane.xlu0 %765
        %v767 = vsel %vm376, %v250, 0.0
        %768 = vadd.xlane.f32.xlu0 %v767
        %v769 = vpop.xlane.xlu0 %768
        %v770 = vsel %vm376, %v251, 0.0
        %771 = vadd.xlane.f32.xlu0 %v770
        %v772 = vpop.xlane.xlu0 %771
        %v773 = vsel %vm376, %v252, 0.0
        %774 = vadd.xlane.f32.xlu0 %v773
        %v775 = vpop.xlane.xlu0 %774
        %v776 = vsel %vm376, %v253, 0.0
        %777 = vadd.xlane.f32.xlu0 %v776
        %v778 = vpop.xlane.xlu0 %777
        %v779 = vsel %vm376, %v254, 0.0
        %780 = vadd.xlane.f32.xlu0 %v779
        %v781 = vpop.xlane.xlu0 %780
        %v782 = vsel %vm376, %v255, 0.0
        %783 = vadd.xlane.f32.xlu0 %v782
        %v784 = vpop.xlane.xlu0 %783
        %v785 = vsel %vm376, %v256, 0.0
        %786 = vadd.xlane.f32.xlu0 %v785
        %v787 = vpop.xlane.xlu0 %786
        %v788 = vsel %vm376, %v257, 0.0
        %789 = vadd.xlane.f32.xlu0 %v788
        %v790 = vpop.xlane.xlu0 %789
        %v791 = vsel %vm376, %v258, 0.0
        %792 = vadd.xlane.f32.xlu0 %v791
        %v793 = vpop.xlane.xlu0 %792
        %v794 = vsel %vm376, %v259, 0.0
        %795 = vadd.xlane.f32.xlu0 %v794
        %v796 = vpop.xlane.xlu0 %795
        %v797 = vsel %vm376, %v260, 0.0
        %798 = vadd.xlane.f32.xlu0 %v797
        %v799 = vpop.xlane.xlu0 %798
        %v800 = vsel %vm376, %v261, 0.0
        %801 = vadd.xlane.f32.xlu0 %v800
        %v802 = vpop.xlane.xlu0 %801
        %v803 = vsel %vm376, %v262, 0.0
        %804 = vadd.xlane.f32.xlu0 %v803
        %v805 = vpop.xlane.xlu0 %804
        %v806 = vsel %vm376, %v263, 0.0
        %807 = vadd.xlane.f32.xlu0 %v806
        %v808 = vpop.xlane.xlu0 %807
        %v809 = vsel %vm376, %v264, 0.0
        %810 = vadd.xlane.f32.xlu0 %v809
        %v811 = vpop.xlane.xlu0 %810
        %v812 = vsel %vm376, %v265, 0.0
        %813 = vadd.xlane.f32.xlu0 %v812
        %v814 = vpop.xlane.xlu0 %813
        %v815 = vsel %vm376, %v266, 0.0
        %816 = vadd.xlane.f32.xlu0 %v815
        %v817 = vpop.xlane.xlu0 %816
        %v818 = vsel %vm376, %v267, 0.0
        %819 = vadd.xlane.f32.xlu0 %v818
        %v820 = vpop.xlane.xlu0 %819
        %v821 = vsel %vm376, %v268, 0.0
        %822 = vadd.xlane.f32.xlu0 %v821
        %v823 = vpop.xlane.xlu0 %822
        %v824 = vsel %vm376, %v269, 0.0
        %825 = vadd.xlane.f32.xlu0 %v824
        %v826 = vpop.xlane.xlu0 %825
        %v827 = vsel %vm376, %v270, 0.0
        %828 = vadd.xlane.f32.xlu0 %v827
        %v829 = vpop.xlane.xlu0 %828
        %v830 = vsel %vm376, %v271, 0.0
        %831 = vadd.xlane.f32.xlu0 %v830
        %v832 = vpop.xlane.xlu0 %831
        %v833 = vsel %vm376, %v272, 0.0
        %834 = vadd.xlane.f32.xlu0 %v833
        %v835 = vpop.xlane.xlu0 %834
        %v836 = vsel %vm376, %v273, 0.0
        %837 = vadd.xlane.f32.xlu0 %v836
        %v838 = vpop.xlane.xlu0 %837
        %v839 = vsel %vm376, %v274, 0.0
        %840 = vadd.xlane.f32.xlu0 %v839
        %v841 = vpop.xlane.xlu0 %840
        %v842 = vsel %vm376, %v275, 0.0
        %843 = vadd.xlane.f32.xlu0 %v842
        %v844 = vpop.xlane.xlu0 %843
        %v845 = vsel %vm376, %v276, 0.0
        %846 = vadd.xlane.f32.xlu0 %v845
        %v847 = vpop.xlane.xlu0 %846
        %v848 = vsel %vm376, %v277, 0.0
        %849 = vadd.xlane.f32.xlu0 %v848
        %v850 = vpop.xlane.xlu0 %849
        %v851 = vsel %vm376, %v278, 0.0
        %852 = vadd.xlane.f32.xlu0 %v851
        %v853 = vpop.xlane.xlu0 %852
        %v854 = vsel %vm376, %v279, 0.0
        %855 = vadd.xlane.f32.xlu0 %v854
        %v856 = vpop.xlane.xlu0 %855
        %v857 = vsel %vm376, %v280, 0.0
        %858 = vadd.xlane.f32.xlu0 %v857
        %v859 = vpop.xlane.xlu0 %858
        %v860 = vsel %vm376, %v281, 0.0
        %861 = vadd.xlane.f32.xlu0 %v860
        %v862 = vpop.xlane.xlu0 %861
        %v863 = vsel %vm376, %v282, 0.0
        %864 = vadd.xlane.f32.xlu0 %v863
        %v865 = vpop.xlane.xlu0 %864
        %v866 = vsel %vm376, %v283, 0.0
        %867 = vadd.xlane.f32.xlu0 %v866
        %v868 = vpop.xlane.xlu0 %867
        %v869 = vsel %vm376, %v284, 0.0
        %870 = vadd.xlane.f32.xlu0 %v869
        %v871 = vpop.xlane.xlu0 %870
        %v872 = vsel %vm376, %v285, 0.0
        %873 = vadd.xlane.f32.xlu0 %v872
        %v874 = vpop.xlane.xlu0 %873
        %v875 = vsel %vm376, %v286, 0.0
        %876 = vadd.xlane.f32.xlu0 %v875
        %v877 = vpop.xlane.xlu0 %876
        %v878 = vsel %vm376, %v287, 0.0
        %879 = vadd.xlane.f32.xlu0 %v878
        %v880 = vpop.xlane.xlu0 %879
        %v881 = vsel %vm376, %v288, 0.0
        %882 = vadd.xlane.f32.xlu0 %v881
        %v883 = vpop.xlane.xlu0 %882
        %v884 = vsel %vm376, %v289, 0.0
        %885 = vadd.xlane.f32.xlu0 %v884
        %v886 = vpop.xlane.xlu0 %885
        %v887 = vsel %vm376, %v290, 0.0
        %888 = vadd.xlane.f32.xlu0 %v887
        %v889 = vpop.xlane.xlu0 %888
        %v890 = vsel %vm376, %v291, 0.0
        %891 = vadd.xlane.f32.xlu0 %v890
        %v892 = vpop.xlane.xlu0 %891
        %v893 = vsel %vm376, %v292, 0.0
        %894 = vadd.xlane.f32.xlu0 %v893
        %v895 = vpop.xlane.xlu0 %894
        %v896 = vsel %vm376, %v293, 0.0
        %897 = vadd.xlane.f32.xlu0 %v896
        %v898 = vpop.xlane.xlu0 %897
        %v899 = vsel %vm376, %v294, 0.0
        %900 = vadd.xlane.f32.xlu0 %v899
        %v901 = vpop.xlane.xlu0 %900
        %v902 = vsel %vm376, %v295, 0.0
        %903 = vadd.xlane.f32.xlu0 %v902
        %v904 = vpop.xlane.xlu0 %903
        %v905 = vsel %vm376, %v296, 0.0
        %906 = vadd.xlane.f32.xlu0 %v905
        %v907 = vpop.xlane.xlu0 %906
        %v908 = vsel %vm376, %v297, 0.0
        %909 = vadd.xlane.f32.xlu0 %v908
        %v910 = vpop.xlane.xlu0 %909
        %v911 = vsel %vm376, %v298, 0.0
        %912 = vadd.xlane.f32.xlu0 %v911
        %v913 = vpop.xlane.xlu0 %912
        %v914 = vsel %vm376, %v299, 0.0
        %915 = vadd.xlane.f32.xlu0 %v914
        %v916 = vpop.xlane.xlu0 %915
        %v917 = vsel %vm376, %v300, 0.0
        %918 = vadd.xlane.f32.xlu0 %v917
        %v919 = vpop.xlane.xlu0 %918
        %v920 = vsel %vm376, %v301, 0.0
        %921 = vadd.xlane.f32.xlu0 %v920
        %v922 = vpop.xlane.xlu0 %921
        %v923 = vsel %vm376, %v302, 0.0
        %924 = vadd.xlane.f32.xlu0 %v923
        %v925 = vpop.xlane.xlu0 %924
        %v926 = vsel %vm376, %v303, 0.0
        %927 = vadd.xlane.f32.xlu0 %v926
        %v928 = vpop.xlane.xlu0 %927
        %v929 = vsel %vm376, %v304, 0.0
        %930 = vadd.xlane.f32.xlu0 %v929
        %v931 = vpop.xlane.xlu0 %930
        %v932 = vsel %vm376, %v305, 0.0
        %933 = vadd.xlane.f32.xlu0 %v932
        %v934 = vpop.xlane.xlu0 %933
        %v935 = vsel %vm376, %v306, 0.0
        %936 = vadd.xlane.f32.xlu0 %v935
        %v937 = vpop.xlane.xlu0 %936
        %v938 = vsel %vm376, %v307, 0.0
        %939 = vadd.xlane.f32.xlu0 %v938
        %v940 = vpop.xlane.xlu0 %939
        %v941 = vsel %vm376, %v308, 0.0
        %942 = vadd.xlane.f32.xlu0 %v941
        %v943 = vpop.xlane.xlu0 %942
        %v944 = vsel %vm376, %v309, 0.0
        %945 = vadd.xlane.f32.xlu0 %v944
        %v946 = vpop.xlane.xlu0 %945
        %v947 = vsel %vm376, %v310, 0.0
        %948 = vadd.xlane.f32.xlu0 %v947
        %v949 = vpop.xlane.xlu0 %948
        %v950 = vsel %vm376, %v311, 0.0
        %951 = vadd.xlane.f32.xlu0 %v950
        %v952 = vpop.xlane.xlu0 %951
        %v953 = vsel %vm376, %v312, 0.0
        %954 = vadd.xlane.f32.xlu0 %v953
        %v955 = vpop.xlane.xlu0 %954
        %v956 = vsel %vm376, %v313, 0.0
        %957 = vadd.xlane.f32.xlu0 %v956
        %v958 = vpop.xlane.xlu0 %957
        %v959 = vsel %vm376, %v314, 0.0
        %960 = vadd.xlane.f32.xlu0 %v959
        %v961 = vpop.xlane.xlu0 %960
        %v962 = vsel %vm376, %v315, 0.0
        %963 = vadd.xlane.f32.xlu0 %v962
        %v964 = vpop.xlane.xlu0 %963
        %v965 = vsel %vm376, %v316, 0.0
        %966 = vadd.xlane.f32.xlu0 %v965
        %v967 = vpop.xlane.xlu0 %966
        %v968 = vsel %vm376, %v317, 0.0
        %969 = vadd.xlane.f32.xlu0 %v968
        %v970 = vpop.xlane.xlu0 %969
        %v971 = vsel %vm376, %v318, 0.0
        %972 = vadd.xlane.f32.xlu0 %v971
        %v973 = vpop.xlane.xlu0 %972
        %v974 = vsel %vm376, %v319, 0.0
        %975 = vadd.xlane.f32.xlu0 %v974
        %v976 = vpop.xlane.xlu0 %975
        %v977 = vsel %vm376, %v320, 0.0
        %978 = vadd.xlane.f32.xlu0 %v977
        %v979 = vpop.xlane.xlu0 %978
        %v980 = vsel %vm376, %v321, 0.0
        %981 = vadd.xlane.f32.xlu0 %v980
        %v982 = vpop.xlane.xlu0 %981
        %v983 = vsel %vm376, %v322, 0.0
        %984 = vadd.xlane.f32.xlu0 %v983
        %v985 = vpop.xlane.xlu0 %984
        %v986 = vsel %vm376, %v323, 0.0
        %987 = vadd.xlane.f32.xlu0 %v986
        %v988 = vpop.xlane.xlu0 %987
        %v989 = vsel %vm376, %v324, 0.0
        %990 = vadd.xlane.f32.xlu0 %v989
        %v991 = vpop.xlane.xlu0 %990
        %v992 = vsel %vm376, %v325, 0.0
        %993 = vadd.xlane.f32.xlu0 %v992
        %v994 = vpop.xlane.xlu0 %993
        %v995 = vsel %vm376, %v326, 0.0
        %996 = vadd.xlane.f32.xlu0 %v995
        %v997 = vpop.xlane.xlu0 %996
        %v998 = vsel %vm376, %v327, 0.0
        %999 = vadd.xlane.f32.xlu0 %v998
        %v1000 = vpop.xlane.xlu0 %999
        %v1001 = vsel %vm376, %v328, 0.0
        %1002 = vadd.xlane.f32.xlu0 %v1001
        %v1003 = vpop.xlane.xlu0 %1002
        %v1004 = vsel %vm376, %v329, 0.0
        %1005 = vadd.xlane.f32.xlu0 %v1004
        %v1006 = vpop.xlane.xlu0 %1005
        %v1007 = vsel %vm376, %v330, 0.0
        %1008 = vadd.xlane.f32.xlu0 %v1007
        %v1009 = vpop.xlane.xlu0 %1008
        %v1010 = vsel %vm376, %v331, 0.0
        %1011 = vadd.xlane.f32.xlu0 %v1010
        %v1012 = vpop.xlane.xlu0 %1011
        %v1013 = vsel %vm376, %v332, 0.0
        %1014 = vadd.xlane.f32.xlu0 %v1013
        %v1015 = vpop.xlane.xlu0 %1014
        %v1016 = vsel %vm376, %v333, 0.0
        %1017 = vadd.xlane.f32.xlu0 %v1016
        %v1018 = vpop.xlane.xlu0 %1017
        %v1019 = vsel %vm376, %v334, 0.0
        %1020 = vadd.xlane.f32.xlu0 %v1019
        %v1021 = vpop.xlane.xlu0 %1020
        %v1022 = vsel %vm376, %v335, 0.0
        %1023 = vadd.xlane.f32.xlu0 %v1022
        %v1024 = vpop.xlane.xlu0 %1023
        %v1025 = vsel %vm376, %v336, 0.0
        %1026 = vadd.xlane.f32.xlu0 %v1025
        %v1027 = vpop.xlane.xlu0 %1026
        %v1028 = vsel %vm376, %v337, 0.0
        %1029 = vadd.xlane.f32.xlu0 %v1028
        %v1030 = vpop.xlane.xlu0 %1029
        %v1031 = vsel %vm376, %v338, 0.0
        %1032 = vadd.xlane.f32.xlu0 %v1031
        %v1033 = vpop.xlane.xlu0 %1032
        %v1034 = vsel %vm376, %v339, 0.0
        %1035 = vadd.xlane.f32.xlu0 %v1034
        %v1036 = vpop.xlane.xlu0 %1035
        %v1037 = vsel %vm376, %v340, 0.0
        %1038 = vadd.xlane.f32.xlu0 %v1037
        %v1039 = vpop.xlane.xlu0 %1038
        %v1040 = vsel %vm376, %v341, 0.0
        %1041 = vadd.xlane.f32.xlu0 %v1040
        %v1042 = vpop.xlane.xlu0 %1041
        %v1043 = vsel %vm376, %v342, 0.0
        %1044 = vadd.xlane.f32.xlu0 %v1043
        %v1045 = vpop.xlane.xlu0 %1044
        %v1046 = vsel %vm376, %v343, 0.0
        %1047 = vadd.xlane.f32.xlu0 %v1046
        %v1048 = vpop.xlane.xlu0 %1047
        %v1049 = vsel %vm376, %v344, 0.0
        %1050 = vadd.xlane.f32.xlu0 %v1049
        %v1051 = vpop.xlane.xlu0 %1050
        %v1052 = vsel %vm376, %v345, 0.0
        %1053 = vadd.xlane.f32.xlu0 %v1052
        %v1054 = vpop.xlane.xlu0 %1053
        %v1055 = vsel %vm376, %v346, 0.0
        %1056 = vadd.xlane.f32.xlu0 %v1055
        %v1057 = vpop.xlane.xlu0 %1056
        %v1058 = vsel %vm376, %v347, 0.0
        %1059 = vadd.xlane.f32.xlu0 %v1058
        %v1060 = vpop.xlane.xlu0 %1059
        %v1061 = vsel %vm376, %v348, 0.0
        %1062 = vadd.xlane.f32.xlu0 %v1061
        %v1063 = vpop.xlane.xlu0 %1062
        %v1064 = vsel %vm376, %v349, 0.0
        %1065 = vadd.xlane.f32.xlu0 %v1064
        %v1066 = vpop.xlane.xlu0 %1065
        %v1067 = vsel %vm376, %v350, 0.0
        %1068 = vadd.xlane.f32.xlu0 %v1067
        %v1069 = vpop.xlane.xlu0 %1068
        %v1070 = vsel %vm376, %v351, 0.0
        %1071 = vadd.xlane.f32.xlu0 %v1070
        %v1072 = vpop.xlane.xlu0 %1071
        %v1073 = vsel %vm376, %v352, 0.0
        %1074 = vadd.xlane.f32.xlu0 %v1073
        %v1075 = vpop.xlane.xlu0 %1074
        %v1076 = vsel %vm376, %v353, 0.0
        %1077 = vadd.xlane.f32.xlu0 %v1076
        %v1078 = vpop.xlane.xlu0 %1077
        %v1079 = vsel %vm376, %v354, 0.0
        %1080 = vadd.xlane.f32.xlu0 %v1079
        %v1081 = vpop.xlane.xlu0 %1080
        %v1082 = vsel %vm376, %v355, 0.0
        %1083 = vadd.xlane.f32.xlu0 %v1082
        %v1084 = vpop.xlane.xlu0 %1083
        %v1085 = vsel %vm376, %v356, 0.0
        %1086 = vadd.xlane.f32.xlu0 %v1085
        %v1087 = vpop.xlane.xlu0 %1086
        %v1088 = vsel %vm376, %v357, 0.0
        %1089 = vadd.xlane.f32.xlu0 %v1088
        %v1090 = vpop.xlane.xlu0 %1089
        %v1091 = vsel %vm376, %v358, 0.0
        %1092 = vadd.xlane.f32.xlu0 %v1091
        %v1093 = vpop.xlane.xlu0 %1092
        %v1094 = vsel %vm376, %v359, 0.0
        %1095 = vadd.xlane.f32.xlu0 %v1094
        %v1096 = vpop.xlane.xlu0 %1095
        %v1097 = vsel %vm376, %v360, 0.0
        %1098 = vadd.xlane.f32.xlu0 %v1097
        %v1099 = vpop.xlane.xlu0 %1098
        %v1100 = vsel %vm376, %v361, 0.0
        %1101 = vadd.xlane.f32.xlu0 %v1100
        %v1102 = vpop.xlane.xlu0 %1101
        %v1103 = vsel %vm376, %v362, 0.0
        %1104 = vadd.xlane.f32.xlu0 %v1103
        %v1105 = vpop.xlane.xlu0 %1104
        %v1106 = vsel %vm376, %v363, 0.0
        %1107 = vadd.xlane.f32.xlu0 %v1106
        %v1108 = vpop.xlane.xlu0 %1107
        %v1109 = vsel %vm376, %v364, 0.0
        %1110 = vadd.xlane.f32.xlu0 %v1109
        %v1111 = vpop.xlane.xlu0 %1110
        %v1112 = vsel %vm376, %v365, 0.0
        %1113 = vadd.xlane.f32.xlu0 %v1112
        %v1114 = vpop.xlane.xlu0 %1113
        %v1115 = vsel %vm376, %v366, 0.0
        %1116 = vadd.xlane.f32.xlu0 %v1115
        %v1117 = vpop.xlane.xlu0 %1116
        %v1118 = vsel %vm376, %v367, 0.0
        %1119 = vadd.xlane.f32.xlu0 %v1118
        %v1120 = vpop.xlane.xlu0 %1119
        %v1121 = vsel %vm376, %v368, 0.0
        %1122 = vadd.xlane.f32.xlu0 %v1121
        %v1123 = vpop.xlane.xlu0 %1122
        %v1124 = vsel %vm376, %v369, 0.0
        %1125 = vadd.xlane.f32.xlu0 %v1124
        %v1126 = vpop.xlane.xlu0 %1125
        %v1127 = vsel %vm376, %v370, 0.0
        %1128 = vadd.xlane.f32.xlu0 %v1127
        %v1129 = vpop.xlane.xlu0 %1128
        %v1130 = vsel %vm376, %v371, 0.0
        %1131 = vadd.xlane.f32.xlu0 %v1130
        %v1132 = vpop.xlane.xlu0 %1131
        %v1133 = vsel %vm376, %v372, 0.0
        %1134 = vadd.xlane.f32.xlu0 %v1133
        %v1135 = vpop.xlane.xlu0 %1134
        %v1136 = vsel %vm376, %v373, 0.0
        %1137 = vadd.xlane.f32.xlu0 %v1136
        %v1138 = vpop.xlane.xlu0 %1137
        %v1139 = vsel %vm376, %v374, 0.0
        %1140 = vadd.xlane.f32.xlu0 %v1139
        %v1141 = vpop.xlane.xlu0 %1140
        %v1142 = vsel %vm376, %v375, 0.0
        %1143 = vadd.xlane.f32.xlu0 %v1142
        %v1144 = vpop.xlane.xlu0 %1143
        %v1145 = vmul.f32 %v379, 0.015625
        %v1146 = vmul.f32 %v382, 0.015625
        %v1147 = vmul.f32 %v385, 0.015625
        %v1148 = vmul.f32 %v388, 0.015625
        %v1149 = vmul.f32 %v391, 0.015625
        %v1150 = vmul.f32 %v394, 0.015625
        %v1151 = vmul.f32 %v397, 0.015625
        %v1152 = vmul.f32 %v400, 0.015625
        %v1153 = vmul.f32 %v403, 0.015625
        %v1154 = vmul.f32 %v406, 0.015625
        %v1155 = vmul.f32 %v409, 0.015625
        %v1156 = vmul.f32 %v412, 0.015625
        %v1157 = vmul.f32 %v415, 0.015625
        %v1158 = vmul.f32 %v418, 0.015625
        %v1159 = vmul.f32 %v421, 0.015625
        %v1160 = vmul.f32 %v424, 0.015625
        %v1161 = vmul.f32 %v427, 0.015625
        %v1162 = vmul.f32 %v430, 0.015625
        %v1163 = vmul.f32 %v433, 0.015625
        %v1164 = vmul.f32 %v436, 0.015625
        %v1165 = vmul.f32 %v439, 0.015625
        %v1166 = vmul.f32 %v442, 0.015625
        %v1167 = vmul.f32 %v445, 0.015625
        %v1168 = vmul.f32 %v448, 0.015625
        %v1169 = vmul.f32 %v451, 0.015625
        %v1170 = vmul.f32 %v454, 0.015625
        %v1171 = vmul.f32 %v457, 0.015625
        %v1172 = vmul.f32 %v460, 0.015625
        %v1173 = vmul.f32 %v463, 0.015625
        %v1174 = vmul.f32 %v466, 0.015625
        %v1175 = vmul.f32 %v469, 0.015625
        %v1176 = vmul.f32 %v472, 0.015625
        %v1177 = vmul.f32 %v475, 0.015625
        %v1178 = vmul.f32 %v478, 0.015625
        %v1179 = vmul.f32 %v481, 0.015625
        %v1180 = vmul.f32 %v484, 0.015625
        %v1181 = vmul.f32 %v487, 0.015625
        %v1182 = vmul.f32 %v490, 0.015625
        %v1183 = vmul.f32 %v493, 0.015625
        %v1184 = vmul.f32 %v496, 0.015625
        %v1185 = vmul.f32 %v499, 0.015625
        %v1186 = vmul.f32 %v502, 0.015625
        %v1187 = vmul.f32 %v505, 0.015625
        %v1188 = vmul.f32 %v508, 0.015625
        %v1189 = vmul.f32 %v511, 0.015625
        %v1190 = vmul.f32 %v514, 0.015625
        %v1191 = vmul.f32 %v517, 0.015625
        %v1192 = vmul.f32 %v520, 0.015625
        %v1193 = vmul.f32 %v523, 0.015625
        %v1194 = vmul.f32 %v526, 0.015625
        %v1195 = vmul.f32 %v529, 0.015625
        %v1196 = vmul.f32 %v532, 0.015625
        %v1197 = vmul.f32 %v535, 0.015625
        %v1198 = vmul.f32 %v538, 0.015625
        %v1199 = vmul.f32 %v541, 0.015625
        %v1200 = vmul.f32 %v544, 0.015625
        %v1201 = vmul.f32 %v547, 0.015625
        %v1202 = vmul.f32 %v550, 0.015625
        %v1203 = vmul.f32 %v553, 0.015625
        %v1204 = vmul.f32 %v556, 0.015625
        %v1205 = vmul.f32 %v559, 0.015625
        %v1206 = vmul.f32 %v562, 0.015625
        %v1207 = vmul.f32 %v565, 0.015625
        %v1208 = vmul.f32 %v568, 0.015625
        %v1209 = vmul.f32 %v571, 0.015625
        %v1210 = vmul.f32 %v574, 0.015625
        %v1211 = vmul.f32 %v577, 0.015625
        %v1212 = vmul.f32 %v580, 0.015625
        %v1213 = vmul.f32 %v583, 0.015625
        %v1214 = vmul.f32 %v586, 0.015625
        %v1215 = vmul.f32 %v589, 0.015625
        %v1216 = vmul.f32 %v592, 0.015625
        %v1217 = vmul.f32 %v595, 0.015625
        %v1218 = vmul.f32 %v598, 0.015625
        %v1219 = vmul.f32 %v601, 0.015625
        %v1220 = vmul.f32 %v604, 0.015625
        %v1221 = vmul.f32 %v607, 0.015625
        %v1222 = vmul.f32 %v610, 0.015625
        %v1223 = vmul.f32 %v613, 0.015625
        %v1224 = vmul.f32 %v616, 0.015625
        %v1225 = vmul.f32 %v619, 0.015625
        %v1226 = vmul.f32 %v622, 0.015625
        %v1227 = vmul.f32 %v625, 0.015625
        %v1228 = vmul.f32 %v628, 0.015625
        %v1229 = vmul.f32 %v631, 0.015625
        %v1230 = vmul.f32 %v634, 0.015625
        %v1231 = vmul.f32 %v637, 0.015625
        %v1232 = vmul.f32 %v640, 0.015625
        %v1233 = vmul.f32 %v643, 0.015625
        %v1234 = vmul.f32 %v646, 0.015625
        %v1235 = vmul.f32 %v649, 0.015625
        %v1236 = vmul.f32 %v652, 0.015625
        %v1237 = vmul.f32 %v655, 0.015625
        %v1238 = vmul.f32 %v658, 0.015625
        %v1239 = vmul.f32 %v661, 0.015625
        %v1240 = vmul.f32 %v664, 0.015625
        %v1241 = vmul.f32 %v667, 0.015625
        %v1242 = vmul.f32 %v670, 0.015625
        %v1243 = vmul.f32 %v673, 0.015625
        %v1244 = vmul.f32 %v676, 0.015625
        %v1245 = vmul.f32 %v679, 0.015625
        %v1246 = vmul.f32 %v682, 0.015625
        %v1247 = vmul.f32 %v685, 0.015625
        %v1248 = vmul.f32 %v688, 0.015625
        %v1249 = vmul.f32 %v691, 0.015625
        %v1250 = vmul.f32 %v694, 0.015625
        %v1251 = vmul.f32 %v697, 0.015625
        %v1252 = vmul.f32 %v700, 0.015625
        %v1253 = vmul.f32 %v703, 0.015625
        %v1254 = vmul.f32 %v706, 0.015625
        %v1255 = vmul.f32 %v709, 0.015625
        %v1256 = vmul.f32 %v712, 0.015625
        %v1257 = vmul.f32 %v715, 0.015625
        %v1258 = vmul.f32 %v718, 0.015625
        %v1259 = vmul.f32 %v721, 0.015625
        %v1260 = vmul.f32 %v724, 0.015625
        %v1261 = vmul.f32 %v727, 0.015625
        %v1262 = vmul.f32 %v730, 0.015625
        %v1263 = vmul.f32 %v733, 0.015625
        %v1264 = vmul.f32 %v736, 0.015625
        %v1265 = vmul.f32 %v739, 0.015625
        %v1266 = vmul.f32 %v742, 0.015625
        %v1267 = vmul.f32 %v745, 0.015625
        %v1268 = vmul.f32 %v748, 0.015625
        %v1269 = vmul.f32 %v751, 0.015625
        %v1270 = vmul.f32 %v754, 0.015625
        %v1271 = vmul.f32 %v757, 0.015625
        %v1272 = vmul.f32 %v760, 0.015625
        %v1273 = vmul.f32 %v763, 0.015625
        %v1274 = vmul.f32 %v766, 0.015625
        %v1275 = vmul.f32 %v769, 0.015625
        %v1276 = vmul.f32 %v772, 0.015625
        %v1277 = vmul.f32 %v775, 0.015625
        %v1278 = vmul.f32 %v778, 0.015625
        %v1279 = vmul.f32 %v781, 0.015625
        %v1280 = vmul.f32 %v784, 0.015625
        %v1281 = vmul.f32 %v787, 0.015625
        %v1282 = vmul.f32 %v790, 0.015625
        %v1283 = vmul.f32 %v793, 0.015625
        %v1284 = vmul.f32 %v796, 0.015625
        %v1285 = vmul.f32 %v799, 0.015625
        %v1286 = vmul.f32 %v802, 0.015625
        %v1287 = vmul.f32 %v805, 0.015625
        %v1288 = vmul.f32 %v808, 0.015625
        %v1289 = vmul.f32 %v811, 0.015625
        %v1290 = vmul.f32 %v814, 0.015625
        %v1291 = vmul.f32 %v817, 0.015625
        %v1292 = vmul.f32 %v820, 0.015625
        %v1293 = vmul.f32 %v823, 0.015625
        %v1294 = vmul.f32 %v826, 0.015625
        %v1295 = vmul.f32 %v829, 0.015625
        %v1296 = vmul.f32 %v832, 0.015625
        %v1297 = vmul.f32 %v835, 0.015625
        %v1298 = vmul.f32 %v838, 0.015625
        %v1299 = vmul.f32 %v841, 0.015625
        %v1300 = vmul.f32 %v844, 0.015625
        %v1301 = vmul.f32 %v847, 0.015625
        %v1302 = vmul.f32 %v850, 0.015625
        %v1303 = vmul.f32 %v853, 0.015625
        %v1304 = vmul.f32 %v856, 0.015625
        %v1305 = vmul.f32 %v859, 0.015625
        %v1306 = vmul.f32 %v862, 0.015625
        %v1307 = vmul.f32 %v865, 0.015625
        %v1308 = vmul.f32 %v868, 0.015625
        %v1309 = vmul.f32 %v871, 0.015625
        %v1310 = vmul.f32 %v874, 0.015625
        %v1311 = vmul.f32 %v877, 0.015625
        %v1312 = vmul.f32 %v880, 0.015625
        %v1313 = vmul.f32 %v883, 0.015625
        %v1314 = vmul.f32 %v886, 0.015625
        %v1315 = vmul.f32 %v889, 0.015625
        %v1316 = vmul.f32 %v892, 0.015625
        %v1317 = vmul.f32 %v895, 0.015625
        %v1318 = vmul.f32 %v898, 0.015625
        %v1319 = vmul.f32 %v901, 0.015625
        %v1320 = vmul.f32 %v904, 0.015625
        %v1321 = vmul.f32 %v907, 0.015625
        %v1322 = vmul.f32 %v910, 0.015625
        %v1323 = vmul.f32 %v913, 0.015625
        %v1324 = vmul.f32 %v916, 0.015625
        %v1325 = vmul.f32 %v919, 0.015625
        %v1326 = vmul.f32 %v922, 0.015625
        %v1327 = vmul.f32 %v925, 0.015625
        %v1328 = vmul.f32 %v928, 0.015625
        %v1329 = vmul.f32 %v931, 0.015625
        %v1330 = vmul.f32 %v934, 0.015625
        %v1331 = vmul.f32 %v937, 0.015625
        %v1332 = vmul.f32 %v940, 0.015625
        %v1333 = vmul.f32 %v943, 0.015625
        %v1334 = vmul.f32 %v946, 0.015625
        %v1335 = vmul.f32 %v949, 0.015625
        %v1336 = vmul.f32 %v952, 0.015625
        %v1337 = vmul.f32 %v955, 0.015625
        %v1338 = vmul.f32 %v958, 0.015625
        %v1339 = vmul.f32 %v961, 0.015625
        %v1340 = vmul.f32 %v964, 0.015625
        %v1341 = vmul.f32 %v967, 0.015625
        %v1342 = vmul.f32 %v970, 0.015625
        %v1343 = vmul.f32 %v973, 0.015625
        %v1344 = vmul.f32 %v976, 0.015625
        %v1345 = vmul.f32 %v979, 0.015625
        %v1346 = vmul.f32 %v982, 0.015625
        %v1347 = vmul.f32 %v985, 0.015625
        %v1348 = vmul.f32 %v988, 0.015625
        %v1349 = vmul.f32 %v991, 0.015625
        %v1350 = vmul.f32 %v994, 0.015625
        %v1351 = vmul.f32 %v997, 0.015625
        %v1352 = vmul.f32 %v1000, 0.015625
        %v1353 = vmul.f32 %v1003, 0.015625
        %v1354 = vmul.f32 %v1006, 0.015625
        %v1355 = vmul.f32 %v1009, 0.015625
        %v1356 = vmul.f32 %v1012, 0.015625
        %v1357 = vmul.f32 %v1015, 0.015625
        %v1358 = vmul.f32 %v1018, 0.015625
        %v1359 = vmul.f32 %v1021, 0.015625
        %v1360 = vmul.f32 %v1024, 0.015625
        %v1361 = vmul.f32 %v1027, 0.015625
        %v1362 = vmul.f32 %v1030, 0.015625
        %v1363 = vmul.f32 %v1033, 0.015625
        %v1364 = vmul.f32 %v1036, 0.015625
        %v1365 = vmul.f32 %v1039, 0.015625
        %v1366 = vmul.f32 %v1042, 0.015625
        %v1367 = vmul.f32 %v1045, 0.015625
        %v1368 = vmul.f32 %v1048, 0.015625
        %v1369 = vmul.f32 %v1051, 0.015625
        %v1370 = vmul.f32 %v1054, 0.015625
        %v1371 = vmul.f32 %v1057, 0.015625
        %v1372 = vmul.f32 %v1060, 0.015625
        %v1373 = vmul.f32 %v1063, 0.015625
        %v1374 = vmul.f32 %v1066, 0.015625
        %v1375 = vmul.f32 %v1069, 0.015625
        %v1376 = vmul.f32 %v1072, 0.015625
        %v1377 = vmul.f32 %v1075, 0.015625
        %v1378 = vmul.f32 %v1078, 0.015625
        %v1379 = vmul.f32 %v1081, 0.015625
        %v1380 = vmul.f32 %v1084, 0.015625
        %v1381 = vmul.f32 %v1087, 0.015625
        %v1382 = vmul.f32 %v1090, 0.015625
        %v1383 = vmul.f32 %v1093, 0.015625
        %v1384 = vmul.f32 %v1096, 0.015625
        %v1385 = vmul.f32 %v1099, 0.015625
        %v1386 = vmul.f32 %v1102, 0.015625
        %v1387 = vmul.f32 %v1105, 0.015625
        %v1388 = vmul.f32 %v1108, 0.015625
        %v1389 = vmul.f32 %v1111, 0.015625
        %v1390 = vmul.f32 %v1114, 0.015625
        %v1391 = vmul.f32 %v1117, 0.015625
        %v1392 = vmul.f32 %v1120, 0.015625
        %v1393 = vmul.f32 %v1123, 0.015625
        %v1394 = vmul.f32 %v1126, 0.015625
        %v1395 = vmul.f32 %v1129, 0.015625
        %v1396 = vmul.f32 %v1132, 0.015625
        %v1397 = vmul.f32 %v1135, 0.015625
        %v1398 = vmul.f32 %v1138, 0.015625
        %v1399 = vmul.f32 %v1141, 0.015625
        %v1400 = vmul.f32 %v1144, 0.015625
        %v1657 = vlaneseq
        %v1658 = vand.u32 %v1657, 127
        %v1659 = vlaneseq
        %v1660 = vshrl.u32 %v1659, 7
        %v1661 = vsub.s32 %v1658, %v1660
        %v1662 = vrot.slane %v1145, %v1661
        %v1663 = vadd.s32 %v1658, 4294967288
        %v1664 = vlaneseq
        %v1665 = vshrl.u32 %v1664, 7
        %v1666 = vsub.s32 %v1663, %v1665
        %v1667 = vrot.slane %v1146, %v1666
        %vm1668 = vcmask 130112
        %v1669 = vsel %vm1668, %v1667, %v1662
        %v1670 = vadd.s32 %v1658, 4294967280
        %v1671 = vlaneseq
        %v1672 = vshrl.u32 %v1671, 7
        %v1673 = vsub.s32 %v1670, %v1672
        %v1674 = vrot.slane %v1147, %v1673
        %vm1675 = vcmask 195712
        %v1676 = vsel %vm1675, %v1674, %v1669
        %v1677 = vadd.s32 %v1658, 4294967272
        %v1678 = vlaneseq
        %v1679 = vshrl.u32 %v1678, 7
        %v1680 = vsub.s32 %v1677, %v1679
        %v1681 = vrot.slane %v1148, %v1680
        %vm1682 = vcmask 261312
        %v1683 = vsel %vm1682, %v1681, %v1676
        %v1684 = vadd.s32 %v1658, 4294967264
        %v1685 = vlaneseq
        %v1686 = vshrl.u32 %v1685, 7
        %v1687 = vsub.s32 %v1684, %v1686
        %v1688 = vrot.slane %v1149, %v1687
        %vm1689 = vcmask 326912
        %v1690 = vsel %vm1689, %v1688, %v1683
        %v1691 = vadd.s32 %v1658, 4294967256
        %v1692 = vlaneseq
        %v1693 = vshrl.u32 %v1692, 7
        %v1694 = vsub.s32 %v1691, %v1693
        %v1695 = vrot.slane %v1150, %v1694
        %vm1696 = vcmask 392512
        %v1697 = vsel %vm1696, %v1695, %v1690
        %v1698 = vadd.s32 %v1658, 4294967248
        %v1699 = vlaneseq
        %v1700 = vshrl.u32 %v1699, 7
        %v1701 = vsub.s32 %v1698, %v1700
        %v1702 = vrot.slane %v1151, %v1701
        %vm1703 = vcmask 458112
        %v1704 = vsel %vm1703, %v1702, %v1697
        %v1705 = vadd.s32 %v1658, 4294967240
        %v1706 = vlaneseq
        %v1707 = vshrl.u32 %v1706, 7
        %v1708 = vsub.s32 %v1705, %v1707
        %v1709 = vrot.slane %v1152, %v1708
        %vm1710 = vcmask 523712
        %v1711 = vsel %vm1710, %v1709, %v1704
        %v1712 = vadd.s32 %v1658, 4294967232
        %v1713 = vlaneseq
        %v1714 = vshrl.u32 %v1713, 7
        %v1715 = vsub.s32 %v1712, %v1714
        %v1716 = vrot.slane %v1153, %v1715
        %vm1717 = vcmask 589312
        %v1718 = vsel %vm1717, %v1716, %v1711
        %v1719 = vadd.s32 %v1658, 4294967224
        %v1720 = vlaneseq
        %v1721 = vshrl.u32 %v1720, 7
        %v1722 = vsub.s32 %v1719, %v1721
        %v1723 = vrot.slane %v1154, %v1722
        %vm1724 = vcmask 654912
        %v1725 = vsel %vm1724, %v1723, %v1718
        %v1726 = vadd.s32 %v1658, 4294967216
        %v1727 = vlaneseq
        %v1728 = vshrl.u32 %v1727, 7
        %v1729 = vsub.s32 %v1726, %v1728
        %v1730 = vrot.slane %v1155, %v1729
        %vm1731 = vcmask 720512
        %v1732 = vsel %vm1731, %v1730, %v1725
        %v1733 = vadd.s32 %v1658, 4294967208
        %v1734 = vlaneseq
        %v1735 = vshrl.u32 %v1734, 7
        %v1736 = vsub.s32 %v1733, %v1735
        %v1737 = vrot.slane %v1156, %v1736
        %vm1738 = vcmask 786112
        %v1739 = vsel %vm1738, %v1737, %v1732
        %v1740 = vadd.s32 %v1658, 4294967200
        %v1741 = vlaneseq
        %v1742 = vshrl.u32 %v1741, 7
        %v1743 = vsub.s32 %v1740, %v1742
        %v1744 = vrot.slane %v1157, %v1743
        %vm1745 = vcmask 851712
        %v1746 = vsel %vm1745, %v1744, %v1739
        %v1747 = vadd.s32 %v1658, 4294967192
        %v1748 = vlaneseq
        %v1749 = vshrl.u32 %v1748, 7
        %v1750 = vsub.s32 %v1747, %v1749
        %v1751 = vrot.slane %v1158, %v1750
        %vm1752 = vcmask 917312
        %v1753 = vsel %vm1752, %v1751, %v1746
        %v1754 = vadd.s32 %v1658, 4294967184
        %v1755 = vlaneseq
        %v1756 = vshrl.u32 %v1755, 7
        %v1757 = vsub.s32 %v1754, %v1756
        %v1758 = vrot.slane %v1159, %v1757
        %vm1759 = vcmask 982912
        %v1760 = vsel %vm1759, %v1758, %v1753
        %v1761 = vadd.s32 %v1658, 4294967176
        %v1762 = vlaneseq
        %v1763 = vshrl.u32 %v1762, 7
        %v1764 = vsub.s32 %v1761, %v1763
        %v1765 = vrot.slane %v1160, %v1764
        %vm1766 = vcmask 1048512
        %v1767 = vsel %vm1766, %v1765, %v1760
        %v1768 = vlaneseq
        %v1769 = vshrl.u32 %v1768, 7
        %v1770 = vsub.s32 %v1658, %v1769
        %v1771 = vrot.slane %v1161, %v1770
        %v1772 = vlaneseq
        %v1773 = vshrl.u32 %v1772, 7
        %v1774 = vsub.s32 %v1663, %v1773
        %v1775 = vrot.slane %v1162, %v1774
        %v1776 = vsel %vm1668, %v1775, %v1771
        %v1777 = vlaneseq
        %v1778 = vshrl.u32 %v1777, 7
        %v1779 = vsub.s32 %v1670, %v1778
        %v1780 = vrot.slane %v1163, %v1779
        %v1781 = vsel %vm1675, %v1780, %v1776
        %v1782 = vlaneseq
        %v1783 = vshrl.u32 %v1782, 7
        %v1784 = vsub.s32 %v1677, %v1783
        %v1785 = vrot.slane %v1164, %v1784
        %v1786 = vsel %vm1682, %v1785, %v1781
        %v1787 = vlaneseq
        %v1788 = vshrl.u32 %v1787, 7
        %v1789 = vsub.s32 %v1684, %v1788
        %v1790 = vrot.slane %v1165, %v1789
        %v1791 = vsel %vm1689, %v1790, %v1786
        %v1792 = vlaneseq
        %v1793 = vshrl.u32 %v1792, 7
        %v1794 = vsub.s32 %v1691, %v1793
        %v1795 = vrot.slane %v1166, %v1794
        %v1796 = vsel %vm1696, %v1795, %v1791
        %v1797 = vlaneseq
        %v1798 = vshrl.u32 %v1797, 7
        %v1799 = vsub.s32 %v1698, %v1798
        %v1800 = vrot.slane %v1167, %v1799
        %v1801 = vsel %vm1703, %v1800, %v1796
        %v1802 = vlaneseq
        %v1803 = vshrl.u32 %v1802, 7
        %v1804 = vsub.s32 %v1705, %v1803
        %v1805 = vrot.slane %v1168, %v1804
        %v1806 = vsel %vm1710, %v1805, %v1801
        %v1807 = vlaneseq
        %v1808 = vshrl.u32 %v1807, 7
        %v1809 = vsub.s32 %v1712, %v1808
        %v1810 = vrot.slane %v1169, %v1809
        %v1811 = vsel %vm1717, %v1810, %v1806
        %v1812 = vlaneseq
        %v1813 = vshrl.u32 %v1812, 7
        %v1814 = vsub.s32 %v1719, %v1813
        %v1815 = vrot.slane %v1170, %v1814
        %v1816 = vsel %vm1724, %v1815, %v1811
        %v1817 = vlaneseq
        %v1818 = vshrl.u32 %v1817, 7
        %v1819 = vsub.s32 %v1726, %v1818
        %v1820 = vrot.slane %v1171, %v1819
        %v1821 = vsel %vm1731, %v1820, %v1816
        %v1822 = vlaneseq
        %v1823 = vshrl.u32 %v1822, 7
        %v1824 = vsub.s32 %v1733, %v1823
        %v1825 = vrot.slane %v1172, %v1824
        %v1826 = vsel %vm1738, %v1825, %v1821
        %v1827 = vlaneseq
        %v1828 = vshrl.u32 %v1827, 7
        %v1829 = vsub.s32 %v1740, %v1828
        %v1830 = vrot.slane %v1173, %v1829
        %v1831 = vsel %vm1745, %v1830, %v1826
        %v1832 = vlaneseq
        %v1833 = vshrl.u32 %v1832, 7
        %v1834 = vsub.s32 %v1747, %v1833
        %v1835 = vrot.slane %v1174, %v1834
        %v1836 = vsel %vm1752, %v1835, %v1831
        %v1837 = vlaneseq
        %v1838 = vshrl.u32 %v1837, 7
        %v1839 = vsub.s32 %v1754, %v1838
        %v1840 = vrot.slane %v1175, %v1839
        %v1841 = vsel %vm1759, %v1840, %v1836
        %v1842 = vlaneseq
        %v1843 = vshrl.u32 %v1842, 7
        %v1844 = vsub.s32 %v1761, %v1843
        %v1845 = vrot.slane %v1176, %v1844
        %v1846 = vsel %vm1766, %v1845, %v1841
        %v1847 = vlaneseq
        %v1848 = vshrl.u32 %v1847, 7
        %v1849 = vsub.s32 %v1658, %v1848
        %v1850 = vrot.slane %v1177, %v1849
        %v1851 = vlaneseq
        %v1852 = vshrl.u32 %v1851, 7
        %v1853 = vsub.s32 %v1663, %v1852
        %v1854 = vrot.slane %v1178, %v1853
        %v1855 = vsel %vm1668, %v1854, %v1850
        %v1856 = vlaneseq
        %v1857 = vshrl.u32 %v1856, 7
        %v1858 = vsub.s32 %v1670, %v1857
        %v1859 = vrot.slane %v1179, %v1858
        %v1860 = vsel %vm1675, %v1859, %v1855
        %v1861 = vlaneseq
        %v1862 = vshrl.u32 %v1861, 7
        %v1863 = vsub.s32 %v1677, %v1862
        %v1864 = vrot.slane %v1180, %v1863
        %v1865 = vsel %vm1682, %v1864, %v1860
        %v1866 = vlaneseq
        %v1867 = vshrl.u32 %v1866, 7
        %v1868 = vsub.s32 %v1684, %v1867
        %v1869 = vrot.slane %v1181, %v1868
        %v1870 = vsel %vm1689, %v1869, %v1865
        %v1871 = vlaneseq
        %v1872 = vshrl.u32 %v1871, 7
        %v1873 = vsub.s32 %v1691, %v1872
        %v1874 = vrot.slane %v1182, %v1873
        %v1875 = vsel %vm1696, %v1874, %v1870
        %v1876 = vlaneseq
        %v1877 = vshrl.u32 %v1876, 7
        %v1878 = vsub.s32 %v1698, %v1877
        %v1879 = vrot.slane %v1183, %v1878
        %v1880 = vsel %vm1703, %v1879, %v1875
        %v1881 = vlaneseq
        %v1882 = vshrl.u32 %v1881, 7
        %v1883 = vsub.s32 %v1705, %v1882
        %v1884 = vrot.slane %v1184, %v1883
        %v1885 = vsel %vm1710, %v1884, %v1880
        %v1886 = vlaneseq
        %v1887 = vshrl.u32 %v1886, 7
        %v1888 = vsub.s32 %v1712, %v1887
        %v1889 = vrot.slane %v1185, %v1888
        %v1890 = vsel %vm1717, %v1889, %v1885
        %v1891 = vlaneseq
        %v1892 = vshrl.u32 %v1891, 7
        %v1893 = vsub.s32 %v1719, %v1892
        %v1894 = vrot.slane %v1186, %v1893
        %v1895 = vsel %vm1724, %v1894, %v1890
        %v1896 = vlaneseq
        %v1897 = vshrl.u32 %v1896, 7
        %v1898 = vsub.s32 %v1726, %v1897
        %v1899 = vrot.slane %v1187, %v1898
        %v1900 = vsel %vm1731, %v1899, %v1895
        %v1901 = vlaneseq
        %v1902 = vshrl.u32 %v1901, 7
        %v1903 = vsub.s32 %v1733, %v1902
        %v1904 = vrot.slane %v1188, %v1903
        %v1905 = vsel %vm1738, %v1904, %v1900
        %v1906 = vlaneseq
        %v1907 = vshrl.u32 %v1906, 7
        %v1908 = vsub.s32 %v1740, %v1907
        %v1909 = vrot.slane %v1189, %v1908
        %v1910 = vsel %vm1745, %v1909, %v1905
        %v1911 = vlaneseq
        %v1912 = vshrl.u32 %v1911, 7
        %v1913 = vsub.s32 %v1747, %v1912
        %v1914 = vrot.slane %v1190, %v1913
        %v1915 = vsel %vm1752, %v1914, %v1910
        %v1916 = vlaneseq
        %v1917 = vshrl.u32 %v1916, 7
        %v1918 = vsub.s32 %v1754, %v1917
        %v1919 = vrot.slane %v1191, %v1918
        %v1920 = vsel %vm1759, %v1919, %v1915
        %v1921 = vlaneseq
        %v1922 = vshrl.u32 %v1921, 7
        %v1923 = vsub.s32 %v1761, %v1922
        %v1924 = vrot.slane %v1192, %v1923
        %v1925 = vsel %vm1766, %v1924, %v1920
        %v1926 = vlaneseq
        %v1927 = vshrl.u32 %v1926, 7
        %v1928 = vsub.s32 %v1658, %v1927
        %v1929 = vrot.slane %v1193, %v1928
        %v1930 = vlaneseq
        %v1931 = vshrl.u32 %v1930, 7
        %v1932 = vsub.s32 %v1663, %v1931
        %v1933 = vrot.slane %v1194, %v1932
        %v1934 = vsel %vm1668, %v1933, %v1929
        %v1935 = vlaneseq
        %v1936 = vshrl.u32 %v1935, 7
        %v1937 = vsub.s32 %v1670, %v1936
        %v1938 = vrot.slane %v1195, %v1937
        %v1939 = vsel %vm1675, %v1938, %v1934
        %v1940 = vlaneseq
        %v1941 = vshrl.u32 %v1940, 7
        %v1942 = vsub.s32 %v1677, %v1941
        %v1943 = vrot.slane %v1196, %v1942
        %v1944 = vsel %vm1682, %v1943, %v1939
        %v1945 = vlaneseq
        %v1946 = vshrl.u32 %v1945, 7
        %v1947 = vsub.s32 %v1684, %v1946
        %v1948 = vrot.slane %v1197, %v1947
        %v1949 = vsel %vm1689, %v1948, %v1944
        %v1950 = vlaneseq
        %v1951 = vshrl.u32 %v1950, 7
        %v1952 = vsub.s32 %v1691, %v1951
        %v1953 = vrot.slane %v1198, %v1952
        %v1954 = vsel %vm1696, %v1953, %v1949
        %v1955 = vlaneseq
        %v1956 = vshrl.u32 %v1955, 7
        %v1957 = vsub.s32 %v1698, %v1956
        %v1958 = vrot.slane %v1199, %v1957
        %v1959 = vsel %vm1703, %v1958, %v1954
        %v1960 = vlaneseq
        %v1961 = vshrl.u32 %v1960, 7
        %v1962 = vsub.s32 %v1705, %v1961
        %v1963 = vrot.slane %v1200, %v1962
        %v1964 = vsel %vm1710, %v1963, %v1959
        %v1965 = vlaneseq
        %v1966 = vshrl.u32 %v1965, 7
        %v1967 = vsub.s32 %v1712, %v1966
        %v1968 = vrot.slane %v1201, %v1967
        %v1969 = vsel %vm1717, %v1968, %v1964
        %v1970 = vlaneseq
        %v1971 = vshrl.u32 %v1970, 7
        %v1972 = vsub.s32 %v1719, %v1971
        %v1973 = vrot.slane %v1202, %v1972
        %v1974 = vsel %vm1724, %v1973, %v1969
        %v1975 = vlaneseq
        %v1976 = vshrl.u32 %v1975, 7
        %v1977 = vsub.s32 %v1726, %v1976
        %v1978 = vrot.slane %v1203, %v1977
        %v1979 = vsel %vm1731, %v1978, %v1974
        %v1980 = vlaneseq
        %v1981 = vshrl.u32 %v1980, 7
        %v1982 = vsub.s32 %v1733, %v1981
        %v1983 = vrot.slane %v1204, %v1982
        %v1984 = vsel %vm1738, %v1983, %v1979
        %v1985 = vlaneseq
        %v1986 = vshrl.u32 %v1985, 7
        %v1987 = vsub.s32 %v1740, %v1986
        %v1988 = vrot.slane %v1205, %v1987
        %v1989 = vsel %vm1745, %v1988, %v1984
        %v1990 = vlaneseq
        %v1991 = vshrl.u32 %v1990, 7
        %v1992 = vsub.s32 %v1747, %v1991
        %v1993 = vrot.slane %v1206, %v1992
        %v1994 = vsel %vm1752, %v1993, %v1989
        %v1995 = vlaneseq
        %v1996 = vshrl.u32 %v1995, 7
        %v1997 = vsub.s32 %v1754, %v1996
        %v1998 = vrot.slane %v1207, %v1997
        %v1999 = vsel %vm1759, %v1998, %v1994
        %v2000 = vlaneseq
        %v2001 = vshrl.u32 %v2000, 7
        %v2002 = vsub.s32 %v1761, %v2001
        %v2003 = vrot.slane %v1208, %v2002
        %v2004 = vsel %vm1766, %v2003, %v1999
        %v2005 = vlaneseq
        %v2006 = vshrl.u32 %v2005, 7
        %v2007 = vsub.s32 %v1658, %v2006
        %v2008 = vrot.slane %v1209, %v2007
        %v2009 = vlaneseq
        %v2010 = vshrl.u32 %v2009, 7
        %v2011 = vsub.s32 %v1663, %v2010
        %v2012 = vrot.slane %v1210, %v2011
        %v2013 = vsel %vm1668, %v2012, %v2008
        %v2014 = vlaneseq
        %v2015 = vshrl.u32 %v2014, 7
        %v2016 = vsub.s32 %v1670, %v2015
        %v2017 = vrot.slane %v1211, %v2016
        %v2018 = vsel %vm1675, %v2017, %v2013
        %v2019 = vlaneseq
        %v2020 = vshrl.u32 %v2019, 7
        %v2021 = vsub.s32 %v1677, %v2020
        %v2022 = vrot.slane %v1212, %v2021
        %v2023 = vsel %vm1682, %v2022, %v2018
        %v2024 = vlaneseq
        %v2025 = vshrl.u32 %v2024, 7
        %v2026 = vsub.s32 %v1684, %v2025
        %v2027 = vrot.slane %v1213, %v2026
        %v2028 = vsel %vm1689, %v2027, %v2023
        %v2029 = vlaneseq
        %v2030 = vshrl.u32 %v2029, 7
        %v2031 = vsub.s32 %v1691, %v2030
        %v2032 = vrot.slane %v1214, %v2031
        %v2033 = vsel %vm1696, %v2032, %v2028
        %v2034 = vlaneseq
        %v2035 = vshrl.u32 %v2034, 7
        %v2036 = vsub.s32 %v1698, %v2035
        %v2037 = vrot.slane %v1215, %v2036
        %v2038 = vsel %vm1703, %v2037, %v2033
        %v2039 = vlaneseq
        %v2040 = vshrl.u32 %v2039, 7
        %v2041 = vsub.s32 %v1705, %v2040
        %v2042 = vrot.slane %v1216, %v2041
        %v2043 = vsel %vm1710, %v2042, %v2038
        %v2044 = vlaneseq
        %v2045 = vshrl.u32 %v2044, 7
        %v2046 = vsub.s32 %v1712, %v2045
        %v2047 = vrot.slane %v1217, %v2046
        %v2048 = vsel %vm1717, %v2047, %v2043
        %v2049 = vlaneseq
        %v2050 = vshrl.u32 %v2049, 7
        %v2051 = vsub.s32 %v1719, %v2050
        %v2052 = vrot.slane %v1218, %v2051
        %v2053 = vsel %vm1724, %v2052, %v2048
        %v2054 = vlaneseq
        %v2055 = vshrl.u32 %v2054, 7
        %v2056 = vsub.s32 %v1726, %v2055
        %v2057 = vrot.slane %v1219, %v2056
        %v2058 = vsel %vm1731, %v2057, %v2053
        %v2059 = vlaneseq
        %v2060 = vshrl.u32 %v2059, 7
        %v2061 = vsub.s32 %v1733, %v2060
        %v2062 = vrot.slane %v1220, %v2061
        %v2063 = vsel %vm1738, %v2062, %v2058
        %v2064 = vlaneseq
        %v2065 = vshrl.u32 %v2064, 7
        %v2066 = vsub.s32 %v1740, %v2065
        %v2067 = vrot.slane %v1221, %v2066
        %v2068 = vsel %vm1745, %v2067, %v2063
        %v2069 = vlaneseq
        %v2070 = vshrl.u32 %v2069, 7
        %v2071 = vsub.s32 %v1747, %v2070
        %v2072 = vrot.slane %v1222, %v2071
        %v2073 = vsel %vm1752, %v2072, %v2068
        %v2074 = vlaneseq
        %v2075 = vshrl.u32 %v2074, 7
        %v2076 = vsub.s32 %v1754, %v2075
        %v2077 = vrot.slane %v1223, %v2076
        %v2078 = vsel %vm1759, %v2077, %v2073
        %v2079 = vlaneseq
        %v2080 = vshrl.u32 %v2079, 7
        %v2081 = vsub.s32 %v1761, %v2080
        %v2082 = vrot.slane %v1224, %v2081
        %v2083 = vsel %vm1766, %v2082, %v2078
        %v2084 = vlaneseq
        %v2085 = vshrl.u32 %v2084, 7
        %v2086 = vsub.s32 %v1658, %v2085
        %v2087 = vrot.slane %v1225, %v2086
        %v2088 = vlaneseq
        %v2089 = vshrl.u32 %v2088, 7
        %v2090 = vsub.s32 %v1663, %v2089
        %v2091 = vrot.slane %v1226, %v2090
        %v2092 = vsel %vm1668, %v2091, %v2087
        %v2093 = vlaneseq
        %v2094 = vshrl.u32 %v2093, 7
        %v2095 = vsub.s32 %v1670, %v2094
        %v2096 = vrot.slane %v1227, %v2095
        %v2097 = vsel %vm1675, %v2096, %v2092
        %v2098 = vlaneseq
        %v2099 = vshrl.u32 %v2098, 7
        %v2100 = vsub.s32 %v1677, %v2099
        %v2101 = vrot.slane %v1228, %v2100
        %v2102 = vsel %vm1682, %v2101, %v2097
        %v2103 = vlaneseq
        %v2104 = vshrl.u32 %v2103, 7
        %v2105 = vsub.s32 %v1684, %v2104
        %v2106 = vrot.slane %v1229, %v2105
        %v2107 = vsel %vm1689, %v2106, %v2102
        %v2108 = vlaneseq
        %v2109 = vshrl.u32 %v2108, 7
        %v2110 = vsub.s32 %v1691, %v2109
        %v2111 = vrot.slane %v1230, %v2110
        %v2112 = vsel %vm1696, %v2111, %v2107
        %v2113 = vlaneseq
        %v2114 = vshrl.u32 %v2113, 7
        %v2115 = vsub.s32 %v1698, %v2114
        %v2116 = vrot.slane %v1231, %v2115
        %v2117 = vsel %vm1703, %v2116, %v2112
        %v2118 = vlaneseq
        %v2119 = vshrl.u32 %v2118, 7
        %v2120 = vsub.s32 %v1705, %v2119
        %v2121 = vrot.slane %v1232, %v2120
        %v2122 = vsel %vm1710, %v2121, %v2117
        %v2123 = vlaneseq
        %v2124 = vshrl.u32 %v2123, 7
        %v2125 = vsub.s32 %v1712, %v2124
        %v2126 = vrot.slane %v1233, %v2125
        %v2127 = vsel %vm1717, %v2126, %v2122
        %v2128 = vlaneseq
        %v2129 = vshrl.u32 %v2128, 7
        %v2130 = vsub.s32 %v1719, %v2129
        %v2131 = vrot.slane %v1234, %v2130
        %v2132 = vsel %vm1724, %v2131, %v2127
        %v2133 = vlaneseq
        %v2134 = vshrl.u32 %v2133, 7
        %v2135 = vsub.s32 %v1726, %v2134
        %v2136 = vrot.slane %v1235, %v2135
        %v2137 = vsel %vm1731, %v2136, %v2132
        %v2138 = vlaneseq
        %v2139 = vshrl.u32 %v2138, 7
        %v2140 = vsub.s32 %v1733, %v2139
        %v2141 = vrot.slane %v1236, %v2140
        %v2142 = vsel %vm1738, %v2141, %v2137
        %v2143 = vlaneseq
        %v2144 = vshrl.u32 %v2143, 7
        %v2145 = vsub.s32 %v1740, %v2144
        %v2146 = vrot.slane %v1237, %v2145
        %v2147 = vsel %vm1745, %v2146, %v2142
        %v2148 = vlaneseq
        %v2149 = vshrl.u32 %v2148, 7
        %v2150 = vsub.s32 %v1747, %v2149
        %v2151 = vrot.slane %v1238, %v2150
        %v2152 = vsel %vm1752, %v2151, %v2147
        %v2153 = vlaneseq
        %v2154 = vshrl.u32 %v2153, 7
        %v2155 = vsub.s32 %v1754, %v2154
        %v2156 = vrot.slane %v1239, %v2155
        %v2157 = vsel %vm1759, %v2156, %v2152
        %v2158 = vlaneseq
        %v2159 = vshrl.u32 %v2158, 7
        %v2160 = vsub.s32 %v1761, %v2159
        %v2161 = vrot.slane %v1240, %v2160
        %v2162 = vsel %vm1766, %v2161, %v2157
        %v2163 = vlaneseq
        %v2164 = vshrl.u32 %v2163, 7
        %v2165 = vsub.s32 %v1658, %v2164
        %v2166 = vrot.slane %v1241, %v2165
        %v2167 = vlaneseq
        %v2168 = vshrl.u32 %v2167, 7
        %v2169 = vsub.s32 %v1663, %v2168
        %v2170 = vrot.slane %v1242, %v2169
        %v2171 = vsel %vm1668, %v2170, %v2166
        %v2172 = vlaneseq
        %v2173 = vshrl.u32 %v2172, 7
        %v2174 = vsub.s32 %v1670, %v2173
        %v2175 = vrot.slane %v1243, %v2174
        %v2176 = vsel %vm1675, %v2175, %v2171
        %v2177 = vlaneseq
        %v2178 = vshrl.u32 %v2177, 7
        %v2179 = vsub.s32 %v1677, %v2178
        %v2180 = vrot.slane %v1244, %v2179
        %v2181 = vsel %vm1682, %v2180, %v2176
        %v2182 = vlaneseq
        %v2183 = vshrl.u32 %v2182, 7
        %v2184 = vsub.s32 %v1684, %v2183
        %v2185 = vrot.slane %v1245, %v2184
        %v2186 = vsel %vm1689, %v2185, %v2181
        %v2187 = vlaneseq
        %v2188 = vshrl.u32 %v2187, 7
        %v2189 = vsub.s32 %v1691, %v2188
        %v2190 = vrot.slane %v1246, %v2189
        %v2191 = vsel %vm1696, %v2190, %v2186
        %v2192 = vlaneseq
        %v2193 = vshrl.u32 %v2192, 7
        %v2194 = vsub.s32 %v1698, %v2193
        %v2195 = vrot.slane %v1247, %v2194
        %v2196 = vsel %vm1703, %v2195, %v2191
        %v2197 = vlaneseq
        %v2198 = vshrl.u32 %v2197, 7
        %v2199 = vsub.s32 %v1705, %v2198
        %v2200 = vrot.slane %v1248, %v2199
        %v2201 = vsel %vm1710, %v2200, %v2196
        %v2202 = vlaneseq
        %v2203 = vshrl.u32 %v2202, 7
        %v2204 = vsub.s32 %v1712, %v2203
        %v2205 = vrot.slane %v1249, %v2204
        %v2206 = vsel %vm1717, %v2205, %v2201
        %v2207 = vlaneseq
        %v2208 = vshrl.u32 %v2207, 7
        %v2209 = vsub.s32 %v1719, %v2208
        %v2210 = vrot.slane %v1250, %v2209
        %v2211 = vsel %vm1724, %v2210, %v2206
        %v2212 = vlaneseq
        %v2213 = vshrl.u32 %v2212, 7
        %v2214 = vsub.s32 %v1726, %v2213
        %v2215 = vrot.slane %v1251, %v2214
        %v2216 = vsel %vm1731, %v2215, %v2211
        %v2217 = vlaneseq
        %v2218 = vshrl.u32 %v2217, 7
        %v2219 = vsub.s32 %v1733, %v2218
        %v2220 = vrot.slane %v1252, %v2219
        %v2221 = vsel %vm1738, %v2220, %v2216
        %v2222 = vlaneseq
        %v2223 = vshrl.u32 %v2222, 7
        %v2224 = vsub.s32 %v1740, %v2223
        %v2225 = vrot.slane %v1253, %v2224
        %v2226 = vsel %vm1745, %v2225, %v2221
        %v2227 = vlaneseq
        %v2228 = vshrl.u32 %v2227, 7
        %v2229 = vsub.s32 %v1747, %v2228
        %v2230 = vrot.slane %v1254, %v2229
        %v2231 = vsel %vm1752, %v2230, %v2226
        %v2232 = vlaneseq
        %v2233 = vshrl.u32 %v2232, 7
        %v2234 = vsub.s32 %v1754, %v2233
        %v2235 = vrot.slane %v1255, %v2234
        %v2236 = vsel %vm1759, %v2235, %v2231
        %v2237 = vlaneseq
        %v2238 = vshrl.u32 %v2237, 7
        %v2239 = vsub.s32 %v1761, %v2238
        %v2240 = vrot.slane %v1256, %v2239
        %v2241 = vsel %vm1766, %v2240, %v2236
        %v2242 = vlaneseq
        %v2243 = vshrl.u32 %v2242, 7
        %v2244 = vsub.s32 %v1658, %v2243
        %v2245 = vrot.slane %v1257, %v2244
        %v2246 = vlaneseq
        %v2247 = vshrl.u32 %v2246, 7
        %v2248 = vsub.s32 %v1663, %v2247
        %v2249 = vrot.slane %v1258, %v2248
        %v2250 = vsel %vm1668, %v2249, %v2245
        %v2251 = vlaneseq
        %v2252 = vshrl.u32 %v2251, 7
        %v2253 = vsub.s32 %v1670, %v2252
        %v2254 = vrot.slane %v1259, %v2253
        %v2255 = vsel %vm1675, %v2254, %v2250
        %v2256 = vlaneseq
        %v2257 = vshrl.u32 %v2256, 7
        %v2258 = vsub.s32 %v1677, %v2257
        %v2259 = vrot.slane %v1260, %v2258
        %v2260 = vsel %vm1682, %v2259, %v2255
        %v2261 = vlaneseq
        %v2262 = vshrl.u32 %v2261, 7
        %v2263 = vsub.s32 %v1684, %v2262
        %v2264 = vrot.slane %v1261, %v2263
        %v2265 = vsel %vm1689, %v2264, %v2260
        %v2266 = vlaneseq
        %v2267 = vshrl.u32 %v2266, 7
        %v2268 = vsub.s32 %v1691, %v2267
        %v2269 = vrot.slane %v1262, %v2268
        %v2270 = vsel %vm1696, %v2269, %v2265
        %v2271 = vlaneseq
        %v2272 = vshrl.u32 %v2271, 7
        %v2273 = vsub.s32 %v1698, %v2272
        %v2274 = vrot.slane %v1263, %v2273
        %v2275 = vsel %vm1703, %v2274, %v2270
        %v2276 = vlaneseq
        %v2277 = vshrl.u32 %v2276, 7
        %v2278 = vsub.s32 %v1705, %v2277
        %v2279 = vrot.slane %v1264, %v2278
        %v2280 = vsel %vm1710, %v2279, %v2275
        %v2281 = vlaneseq
        %v2282 = vshrl.u32 %v2281, 7
        %v2283 = vsub.s32 %v1712, %v2282
        %v2284 = vrot.slane %v1265, %v2283
        %v2285 = vsel %vm1717, %v2284, %v2280
        %v2286 = vlaneseq
        %v2287 = vshrl.u32 %v2286, 7
        %v2288 = vsub.s32 %v1719, %v2287
        %v2289 = vrot.slane %v1266, %v2288
        %v2290 = vsel %vm1724, %v2289, %v2285
        %v2291 = vlaneseq
        %v2292 = vshrl.u32 %v2291, 7
        %v2293 = vsub.s32 %v1726, %v2292
        %v2294 = vrot.slane %v1267, %v2293
        %v2295 = vsel %vm1731, %v2294, %v2290
        %v2296 = vlaneseq
        %v2297 = vshrl.u32 %v2296, 7
        %v2298 = vsub.s32 %v1733, %v2297
        %v2299 = vrot.slane %v1268, %v2298
        %v2300 = vsel %vm1738, %v2299, %v2295
        %v2301 = vlaneseq
        %v2302 = vshrl.u32 %v2301, 7
        %v2303 = vsub.s32 %v1740, %v2302
        %v2304 = vrot.slane %v1269, %v2303
        %v2305 = vsel %vm1745, %v2304, %v2300
        %v2306 = vlaneseq
        %v2307 = vshrl.u32 %v2306, 7
        %v2308 = vsub.s32 %v1747, %v2307
        %v2309 = vrot.slane %v1270, %v2308
        %v2310 = vsel %vm1752, %v2309, %v2305
        %v2311 = vlaneseq
        %v2312 = vshrl.u32 %v2311, 7
        %v2313 = vsub.s32 %v1754, %v2312
        %v2314 = vrot.slane %v1271, %v2313
        %v2315 = vsel %vm1759, %v2314, %v2310
        %v2316 = vlaneseq
        %v2317 = vshrl.u32 %v2316, 7
        %v2318 = vsub.s32 %v1761, %v2317
        %v2319 = vrot.slane %v1272, %v2318
        %v2320 = vsel %vm1766, %v2319, %v2315
        %v2321 = vlaneseq
        %v2322 = vshrl.u32 %v2321, 7
        %v2323 = vsub.s32 %v1658, %v2322
        %v2324 = vrot.slane %v1273, %v2323
        %v2325 = vlaneseq
        %v2326 = vshrl.u32 %v2325, 7
        %v2327 = vsub.s32 %v1663, %v2326
        %v2328 = vrot.slane %v1274, %v2327
        %v2329 = vsel %vm1668, %v2328, %v2324
        %v2330 = vlaneseq
        %v2331 = vshrl.u32 %v2330, 7
        %v2332 = vsub.s32 %v1670, %v2331
        %v2333 = vrot.slane %v1275, %v2332
        %v2334 = vsel %vm1675, %v2333, %v2329
        %v2335 = vlaneseq
        %v2336 = vshrl.u32 %v2335, 7
        %v2337 = vsub.s32 %v1677, %v2336
        %v2338 = vrot.slane %v1276, %v2337
        %v2339 = vsel %vm1682, %v2338, %v2334
        %v2340 = vlaneseq
        %v2341 = vshrl.u32 %v2340, 7
        %v2342 = vsub.s32 %v1684, %v2341
        %v2343 = vrot.slane %v1277, %v2342
        %v2344 = vsel %vm1689, %v2343, %v2339
        %v2345 = vlaneseq
        %v2346 = vshrl.u32 %v2345, 7
        %v2347 = vsub.s32 %v1691, %v2346
        %v2348 = vrot.slane %v1278, %v2347
        %v2349 = vsel %vm1696, %v2348, %v2344
        %v2350 = vlaneseq
        %v2351 = vshrl.u32 %v2350, 7
        %v2352 = vsub.s32 %v1698, %v2351
        %v2353 = vrot.slane %v1279, %v2352
        %v2354 = vsel %vm1703, %v2353, %v2349
        %v2355 = vlaneseq
        %v2356 = vshrl.u32 %v2355, 7
        %v2357 = vsub.s32 %v1705, %v2356
        %v2358 = vrot.slane %v1280, %v2357
        %v2359 = vsel %vm1710, %v2358, %v2354
        %v2360 = vlaneseq
        %v2361 = vshrl.u32 %v2360, 7
        %v2362 = vsub.s32 %v1712, %v2361
        %v2363 = vrot.slane %v1281, %v2362
        %v2364 = vsel %vm1717, %v2363, %v2359
        %v2365 = vlaneseq
        %v2366 = vshrl.u32 %v2365, 7
        %v2367 = vsub.s32 %v1719, %v2366
        %v2368 = vrot.slane %v1282, %v2367
        %v2369 = vsel %vm1724, %v2368, %v2364
        %v2370 = vlaneseq
        %v2371 = vshrl.u32 %v2370, 7
        %v2372 = vsub.s32 %v1726, %v2371
        %v2373 = vrot.slane %v1283, %v2372
        %v2374 = vsel %vm1731, %v2373, %v2369
        %v2375 = vlaneseq
        %v2376 = vshrl.u32 %v2375, 7
        %v2377 = vsub.s32 %v1733, %v2376
        %v2378 = vrot.slane %v1284, %v2377
        %v2379 = vsel %vm1738, %v2378, %v2374
        %v2380 = vlaneseq
        %v2381 = vshrl.u32 %v2380, 7
        %v2382 = vsub.s32 %v1740, %v2381
        %v2383 = vrot.slane %v1285, %v2382
        %v2384 = vsel %vm1745, %v2383, %v2379
        %v2385 = vlaneseq
        %v2386 = vshrl.u32 %v2385, 7
        %v2387 = vsub.s32 %v1747, %v2386
        %v2388 = vrot.slane %v1286, %v2387
        %v2389 = vsel %vm1752, %v2388, %v2384
        %v2390 = vlaneseq
        %v2391 = vshrl.u32 %v2390, 7
        %v2392 = vsub.s32 %v1754, %v2391
        %v2393 = vrot.slane %v1287, %v2392
        %v2394 = vsel %vm1759, %v2393, %v2389
        %v2395 = vlaneseq
        %v2396 = vshrl.u32 %v2395, 7
        %v2397 = vsub.s32 %v1761, %v2396
        %v2398 = vrot.slane %v1288, %v2397
        %v2399 = vsel %vm1766, %v2398, %v2394
        %v2400 = vlaneseq
        %v2401 = vshrl.u32 %v2400, 7
        %v2402 = vsub.s32 %v1658, %v2401
        %v2403 = vrot.slane %v1289, %v2402
        %v2404 = vlaneseq
        %v2405 = vshrl.u32 %v2404, 7
        %v2406 = vsub.s32 %v1663, %v2405
        %v2407 = vrot.slane %v1290, %v2406
        %v2408 = vsel %vm1668, %v2407, %v2403
        %v2409 = vlaneseq
        %v2410 = vshrl.u32 %v2409, 7
        %v2411 = vsub.s32 %v1670, %v2410
        %v2412 = vrot.slane %v1291, %v2411
        %v2413 = vsel %vm1675, %v2412, %v2408
        %v2414 = vlaneseq
        %v2415 = vshrl.u32 %v2414, 7
        %v2416 = vsub.s32 %v1677, %v2415
        %v2417 = vrot.slane %v1292, %v2416
        %v2418 = vsel %vm1682, %v2417, %v2413
        %v2419 = vlaneseq
        %v2420 = vshrl.u32 %v2419, 7
        %v2421 = vsub.s32 %v1684, %v2420
        %v2422 = vrot.slane %v1293, %v2421
        %v2423 = vsel %vm1689, %v2422, %v2418
        %v2424 = vlaneseq
        %v2425 = vshrl.u32 %v2424, 7
        %v2426 = vsub.s32 %v1691, %v2425
        %v2427 = vrot.slane %v1294, %v2426
        %v2428 = vsel %vm1696, %v2427, %v2423
        %v2429 = vlaneseq
        %v2430 = vshrl.u32 %v2429, 7
        %v2431 = vsub.s32 %v1698, %v2430
        %v2432 = vrot.slane %v1295, %v2431
        %v2433 = vsel %vm1703, %v2432, %v2428
        %v2434 = vlaneseq
        %v2435 = vshrl.u32 %v2434, 7
        %v2436 = vsub.s32 %v1705, %v2435
        %v2437 = vrot.slane %v1296, %v2436
        %v2438 = vsel %vm1710, %v2437, %v2433
        %v2439 = vlaneseq
        %v2440 = vshrl.u32 %v2439, 7
        %v2441 = vsub.s32 %v1712, %v2440
        %v2442 = vrot.slane %v1297, %v2441
        %v2443 = vsel %vm1717, %v2442, %v2438
        %v2444 = vlaneseq
        %v2445 = vshrl.u32 %v2444, 7
        %v2446 = vsub.s32 %v1719, %v2445
        %v2447 = vrot.slane %v1298, %v2446
        %v2448 = vsel %vm1724, %v2447, %v2443
        %v2449 = vlaneseq
        %v2450 = vshrl.u32 %v2449, 7
        %v2451 = vsub.s32 %v1726, %v2450
        %v2452 = vrot.slane %v1299, %v2451
        %v2453 = vsel %vm1731, %v2452, %v2448
        %v2454 = vlaneseq
        %v2455 = vshrl.u32 %v2454, 7
        %v2456 = vsub.s32 %v1733, %v2455
        %v2457 = vrot.slane %v1300, %v2456
        %v2458 = vsel %vm1738, %v2457, %v2453
        %v2459 = vlaneseq
        %v2460 = vshrl.u32 %v2459, 7
        %v2461 = vsub.s32 %v1740, %v2460
        %v2462 = vrot.slane %v1301, %v2461
        %v2463 = vsel %vm1745, %v2462, %v2458
        %v2464 = vlaneseq
        %v2465 = vshrl.u32 %v2464, 7
        %v2466 = vsub.s32 %v1747, %v2465
        %v2467 = vrot.slane %v1302, %v2466
        %v2468 = vsel %vm1752, %v2467, %v2463
        %v2469 = vlaneseq
        %v2470 = vshrl.u32 %v2469, 7
        %v2471 = vsub.s32 %v1754, %v2470
        %v2472 = vrot.slane %v1303, %v2471
        %v2473 = vsel %vm1759, %v2472, %v2468
        %v2474 = vlaneseq
        %v2475 = vshrl.u32 %v2474, 7
        %v2476 = vsub.s32 %v1761, %v2475
        %v2477 = vrot.slane %v1304, %v2476
        %v2478 = vsel %vm1766, %v2477, %v2473
        %v2479 = vlaneseq
        %v2480 = vshrl.u32 %v2479, 7
        %v2481 = vsub.s32 %v1658, %v2480
        %v2482 = vrot.slane %v1305, %v2481
        %v2483 = vlaneseq
        %v2484 = vshrl.u32 %v2483, 7
        %v2485 = vsub.s32 %v1663, %v2484
        %v2486 = vrot.slane %v1306, %v2485
        %v2487 = vsel %vm1668, %v2486, %v2482
        %v2488 = vlaneseq
        %v2489 = vshrl.u32 %v2488, 7
        %v2490 = vsub.s32 %v1670, %v2489
        %v2491 = vrot.slane %v1307, %v2490
        %v2492 = vsel %vm1675, %v2491, %v2487
        %v2493 = vlaneseq
        %v2494 = vshrl.u32 %v2493, 7
        %v2495 = vsub.s32 %v1677, %v2494
        %v2496 = vrot.slane %v1308, %v2495
        %v2497 = vsel %vm1682, %v2496, %v2492
        %v2498 = vlaneseq
        %v2499 = vshrl.u32 %v2498, 7
        %v2500 = vsub.s32 %v1684, %v2499
        %v2501 = vrot.slane %v1309, %v2500
        %v2502 = vsel %vm1689, %v2501, %v2497
        %v2503 = vlaneseq
        %v2504 = vshrl.u32 %v2503, 7
        %v2505 = vsub.s32 %v1691, %v2504
        %v2506 = vrot.slane %v1310, %v2505
        %v2507 = vsel %vm1696, %v2506, %v2502
        %v2508 = vlaneseq
        %v2509 = vshrl.u32 %v2508, 7
        %v2510 = vsub.s32 %v1698, %v2509
        %v2511 = vrot.slane %v1311, %v2510
        %v2512 = vsel %vm1703, %v2511, %v2507
        %v2513 = vlaneseq
        %v2514 = vshrl.u32 %v2513, 7
        %v2515 = vsub.s32 %v1705, %v2514
        %v2516 = vrot.slane %v1312, %v2515
        %v2517 = vsel %vm1710, %v2516, %v2512
        %v2518 = vlaneseq
        %v2519 = vshrl.u32 %v2518, 7
        %v2520 = vsub.s32 %v1712, %v2519
        %v2521 = vrot.slane %v1313, %v2520
        %v2522 = vsel %vm1717, %v2521, %v2517
        %v2523 = vlaneseq
        %v2524 = vshrl.u32 %v2523, 7
        %v2525 = vsub.s32 %v1719, %v2524
        %v2526 = vrot.slane %v1314, %v2525
        %v2527 = vsel %vm1724, %v2526, %v2522
        %v2528 = vlaneseq
        %v2529 = vshrl.u32 %v2528, 7
        %v2530 = vsub.s32 %v1726, %v2529
        %v2531 = vrot.slane %v1315, %v2530
        %v2532 = vsel %vm1731, %v2531, %v2527
        %v2533 = vlaneseq
        %v2534 = vshrl.u32 %v2533, 7
        %v2535 = vsub.s32 %v1733, %v2534
        %v2536 = vrot.slane %v1316, %v2535
        %v2537 = vsel %vm1738, %v2536, %v2532
        %v2538 = vlaneseq
        %v2539 = vshrl.u32 %v2538, 7
        %v2540 = vsub.s32 %v1740, %v2539
        %v2541 = vrot.slane %v1317, %v2540
        %v2542 = vsel %vm1745, %v2541, %v2537
        %v2543 = vlaneseq
        %v2544 = vshrl.u32 %v2543, 7
        %v2545 = vsub.s32 %v1747, %v2544
        %v2546 = vrot.slane %v1318, %v2545
        %v2547 = vsel %vm1752, %v2546, %v2542
        %v2548 = vlaneseq
        %v2549 = vshrl.u32 %v2548, 7
        %v2550 = vsub.s32 %v1754, %v2549
        %v2551 = vrot.slane %v1319, %v2550
        %v2552 = vsel %vm1759, %v2551, %v2547
        %v2553 = vlaneseq
        %v2554 = vshrl.u32 %v2553, 7
        %v2555 = vsub.s32 %v1761, %v2554
        %v2556 = vrot.slane %v1320, %v2555
        %v2557 = vsel %vm1766, %v2556, %v2552
        %v2558 = vlaneseq
        %v2559 = vshrl.u32 %v2558, 7
        %v2560 = vsub.s32 %v1658, %v2559
        %v2561 = vrot.slane %v1321, %v2560
        %v2562 = vlaneseq
        %v2563 = vshrl.u32 %v2562, 7
        %v2564 = vsub.s32 %v1663, %v2563
        %v2565 = vrot.slane %v1322, %v2564
        %v2566 = vsel %vm1668, %v2565, %v2561
        %v2567 = vlaneseq
        %v2568 = vshrl.u32 %v2567, 7
        %v2569 = vsub.s32 %v1670, %v2568
        %v2570 = vrot.slane %v1323, %v2569
        %v2571 = vsel %vm1675, %v2570, %v2566
        %v2572 = vlaneseq
        %v2573 = vshrl.u32 %v2572, 7
        %v2574 = vsub.s32 %v1677, %v2573
        %v2575 = vrot.slane %v1324, %v2574
        %v2576 = vsel %vm1682, %v2575, %v2571
        %v2577 = vlaneseq
        %v2578 = vshrl.u32 %v2577, 7
        %v2579 = vsub.s32 %v1684, %v2578
        %v2580 = vrot.slane %v1325, %v2579
        %v2581 = vsel %vm1689, %v2580, %v2576
        %v2582 = vlaneseq
        %v2583 = vshrl.u32 %v2582, 7
        %v2584 = vsub.s32 %v1691, %v2583
        %v2585 = vrot.slane %v1326, %v2584
        %v2586 = vsel %vm1696, %v2585, %v2581
        %v2587 = vlaneseq
        %v2588 = vshrl.u32 %v2587, 7
        %v2589 = vsub.s32 %v1698, %v2588
        %v2590 = vrot.slane %v1327, %v2589
        %v2591 = vsel %vm1703, %v2590, %v2586
        %v2592 = vlaneseq
        %v2593 = vshrl.u32 %v2592, 7
        %v2594 = vsub.s32 %v1705, %v2593
        %v2595 = vrot.slane %v1328, %v2594
        %v2596 = vsel %vm1710, %v2595, %v2591
        %v2597 = vlaneseq
        %v2598 = vshrl.u32 %v2597, 7
        %v2599 = vsub.s32 %v1712, %v2598
        %v2600 = vrot.slane %v1329, %v2599
        %v2601 = vsel %vm1717, %v2600, %v2596
        %v2602 = vlaneseq
        %v2603 = vshrl.u32 %v2602, 7
        %v2604 = vsub.s32 %v1719, %v2603
        %v2605 = vrot.slane %v1330, %v2604
        %v2606 = vsel %vm1724, %v2605, %v2601
        %v2607 = vlaneseq
        %v2608 = vshrl.u32 %v2607, 7
        %v2609 = vsub.s32 %v1726, %v2608
        %v2610 = vrot.slane %v1331, %v2609
        %v2611 = vsel %vm1731, %v2610, %v2606
        %v2612 = vlaneseq
        %v2613 = vshrl.u32 %v2612, 7
        %v2614 = vsub.s32 %v1733, %v2613
        %v2615 = vrot.slane %v1332, %v2614
        %v2616 = vsel %vm1738, %v2615, %v2611
        %v2617 = vlaneseq
        %v2618 = vshrl.u32 %v2617, 7
        %v2619 = vsub.s32 %v1740, %v2618
        %v2620 = vrot.slane %v1333, %v2619
        %v2621 = vsel %vm1745, %v2620, %v2616
        %v2622 = vlaneseq
        %v2623 = vshrl.u32 %v2622, 7
        %v2624 = vsub.s32 %v1747, %v2623
        %v2625 = vrot.slane %v1334, %v2624
        %v2626 = vsel %vm1752, %v2625, %v2621
        %v2627 = vlaneseq
        %v2628 = vshrl.u32 %v2627, 7
        %v2629 = vsub.s32 %v1754, %v2628
        %v2630 = vrot.slane %v1335, %v2629
        %v2631 = vsel %vm1759, %v2630, %v2626
        %v2632 = vlaneseq
        %v2633 = vshrl.u32 %v2632, 7
        %v2634 = vsub.s32 %v1761, %v2633
        %v2635 = vrot.slane %v1336, %v2634
        %v2636 = vsel %vm1766, %v2635, %v2631
        %v2637 = vlaneseq
        %v2638 = vshrl.u32 %v2637, 7
        %v2639 = vsub.s32 %v1658, %v2638
        %v2640 = vrot.slane %v1337, %v2639
        %v2641 = vlaneseq
        %v2642 = vshrl.u32 %v2641, 7
        %v2643 = vsub.s32 %v1663, %v2642
        %v2644 = vrot.slane %v1338, %v2643
        %v2645 = vsel %vm1668, %v2644, %v2640
        %v2646 = vlaneseq
        %v2647 = vshrl.u32 %v2646, 7
        %v2648 = vsub.s32 %v1670, %v2647
        %v2649 = vrot.slane %v1339, %v2648
        %v2650 = vsel %vm1675, %v2649, %v2645
        %v2651 = vlaneseq
        %v2652 = vshrl.u32 %v2651, 7
        %v2653 = vsub.s32 %v1677, %v2652
        %v2654 = vrot.slane %v1340, %v2653
        %v2655 = vsel %vm1682, %v2654, %v2650
        %v2656 = vlaneseq
        %v2657 = vshrl.u32 %v2656, 7
        %v2658 = vsub.s32 %v1684, %v2657
        %v2659 = vrot.slane %v1341, %v2658
        %v2660 = vsel %vm1689, %v2659, %v2655
        %v2661 = vlaneseq
        %v2662 = vshrl.u32 %v2661, 7
        %v2663 = vsub.s32 %v1691, %v2662
        %v2664 = vrot.slane %v1342, %v2663
        %v2665 = vsel %vm1696, %v2664, %v2660
        %v2666 = vlaneseq
        %v2667 = vshrl.u32 %v2666, 7
        %v2668 = vsub.s32 %v1698, %v2667
        %v2669 = vrot.slane %v1343, %v2668
        %v2670 = vsel %vm1703, %v2669, %v2665
        %v2671 = vlaneseq
        %v2672 = vshrl.u32 %v2671, 7
        %v2673 = vsub.s32 %v1705, %v2672
        %v2674 = vrot.slane %v1344, %v2673
        %v2675 = vsel %vm1710, %v2674, %v2670
        %v2676 = vlaneseq
        %v2677 = vshrl.u32 %v2676, 7
        %v2678 = vsub.s32 %v1712, %v2677
        %v2679 = vrot.slane %v1345, %v2678
        %v2680 = vsel %vm1717, %v2679, %v2675
        %v2681 = vlaneseq
        %v2682 = vshrl.u32 %v2681, 7
        %v2683 = vsub.s32 %v1719, %v2682
        %v2684 = vrot.slane %v1346, %v2683
        %v2685 = vsel %vm1724, %v2684, %v2680
        %v2686 = vlaneseq
        %v2687 = vshrl.u32 %v2686, 7
        %v2688 = vsub.s32 %v1726, %v2687
        %v2689 = vrot.slane %v1347, %v2688
        %v2690 = vsel %vm1731, %v2689, %v2685
        %v2691 = vlaneseq
        %v2692 = vshrl.u32 %v2691, 7
        %v2693 = vsub.s32 %v1733, %v2692
        %v2694 = vrot.slane %v1348, %v2693
        %v2695 = vsel %vm1738, %v2694, %v2690
        %v2696 = vlaneseq
        %v2697 = vshrl.u32 %v2696, 7
        %v2698 = vsub.s32 %v1740, %v2697
        %v2699 = vrot.slane %v1349, %v2698
        %v2700 = vsel %vm1745, %v2699, %v2695
        %v2701 = vlaneseq
        %v2702 = vshrl.u32 %v2701, 7
        %v2703 = vsub.s32 %v1747, %v2702
        %v2704 = vrot.slane %v1350, %v2703
        %v2705 = vsel %vm1752, %v2704, %v2700
        %v2706 = vlaneseq
        %v2707 = vshrl.u32 %v2706, 7
        %v2708 = vsub.s32 %v1754, %v2707
        %v2709 = vrot.slane %v1351, %v2708
        %v2710 = vsel %vm1759, %v2709, %v2705
        %v2711 = vlaneseq
        %v2712 = vshrl.u32 %v2711, 7
        %v2713 = vsub.s32 %v1761, %v2712
        %v2714 = vrot.slane %v1352, %v2713
        %v2715 = vsel %vm1766, %v2714, %v2710
        %v2716 = vlaneseq
        %v2717 = vshrl.u32 %v2716, 7
        %v2718 = vsub.s32 %v1658, %v2717
        %v2719 = vrot.slane %v1353, %v2718
        %v2720 = vlaneseq
        %v2721 = vshrl.u32 %v2720, 7
        %v2722 = vsub.s32 %v1663, %v2721
        %v2723 = vrot.slane %v1354, %v2722
        %v2724 = vsel %vm1668, %v2723, %v2719
        %v2725 = vlaneseq
        %v2726 = vshrl.u32 %v2725, 7
        %v2727 = vsub.s32 %v1670, %v2726
        %v2728 = vrot.slane %v1355, %v2727
        %v2729 = vsel %vm1675, %v2728, %v2724
        %v2730 = vlaneseq
        %v2731 = vshrl.u32 %v2730, 7
        %v2732 = vsub.s32 %v1677, %v2731
        %v2733 = vrot.slane %v1356, %v2732
        %v2734 = vsel %vm1682, %v2733, %v2729
        %v2735 = vlaneseq
        %v2736 = vshrl.u32 %v2735, 7
        %v2737 = vsub.s32 %v1684, %v2736
        %v2738 = vrot.slane %v1357, %v2737
        %v2739 = vsel %vm1689, %v2738, %v2734
        %v2740 = vlaneseq
        %v2741 = vshrl.u32 %v2740, 7
        %v2742 = vsub.s32 %v1691, %v2741
        %v2743 = vrot.slane %v1358, %v2742
        %v2744 = vsel %vm1696, %v2743, %v2739
        %v2745 = vlaneseq
        %v2746 = vshrl.u32 %v2745, 7
        %v2747 = vsub.s32 %v1698, %v2746
        %v2748 = vrot.slane %v1359, %v2747
        %v2749 = vsel %vm1703, %v2748, %v2744
        %v2750 = vlaneseq
        %v2751 = vshrl.u32 %v2750, 7
        %v2752 = vsub.s32 %v1705, %v2751
        %v2753 = vrot.slane %v1360, %v2752
        %v2754 = vsel %vm1710, %v2753, %v2749
        %v2755 = vlaneseq
        %v2756 = vshrl.u32 %v2755, 7
        %v2757 = vsub.s32 %v1712, %v2756
        %v2758 = vrot.slane %v1361, %v2757
        %v2759 = vsel %vm1717, %v2758, %v2754
        %v2760 = vlaneseq
        %v2761 = vshrl.u32 %v2760, 7
        %v2762 = vsub.s32 %v1719, %v2761
        %v2763 = vrot.slane %v1362, %v2762
        %v2764 = vsel %vm1724, %v2763, %v2759
        %v2765 = vlaneseq
        %v2766 = vshrl.u32 %v2765, 7
        %v2767 = vsub.s32 %v1726, %v2766
        %v2768 = vrot.slane %v1363, %v2767
        %v2769 = vsel %vm1731, %v2768, %v2764
        %v2770 = vlaneseq
        %v2771 = vshrl.u32 %v2770, 7
        %v2772 = vsub.s32 %v1733, %v2771
        %v2773 = vrot.slane %v1364, %v2772
        %v2774 = vsel %vm1738, %v2773, %v2769
        %v2775 = vlaneseq
        %v2776 = vshrl.u32 %v2775, 7
        %v2777 = vsub.s32 %v1740, %v2776
        %v2778 = vrot.slane %v1365, %v2777
        %v2779 = vsel %vm1745, %v2778, %v2774
        %v2780 = vlaneseq
        %v2781 = vshrl.u32 %v2780, 7
        %v2782 = vsub.s32 %v1747, %v2781
        %v2783 = vrot.slane %v1366, %v2782
        %v2784 = vsel %vm1752, %v2783, %v2779
        %v2785 = vlaneseq
        %v2786 = vshrl.u32 %v2785, 7
        %v2787 = vsub.s32 %v1754, %v2786
        %v2788 = vrot.slane %v1367, %v2787
        %v2789 = vsel %vm1759, %v2788, %v2784
        %v2790 = vlaneseq
        %v2791 = vshrl.u32 %v2790, 7
        %v2792 = vsub.s32 %v1761, %v2791
        %v2793 = vrot.slane %v1368, %v2792
        %v2794 = vsel %vm1766, %v2793, %v2789
        %v2795 = vlaneseq
        %v2796 = vshrl.u32 %v2795, 7
        %v2797 = vsub.s32 %v1658, %v2796
        %v2798 = vrot.slane %v1369, %v2797
        %v2799 = vlaneseq
        %v2800 = vshrl.u32 %v2799, 7
        %v2801 = vsub.s32 %v1663, %v2800
        %v2802 = vrot.slane %v1370, %v2801
        %v2803 = vsel %vm1668, %v2802, %v2798
        %v2804 = vlaneseq
        %v2805 = vshrl.u32 %v2804, 7
        %v2806 = vsub.s32 %v1670, %v2805
        %v2807 = vrot.slane %v1371, %v2806
        %v2808 = vsel %vm1675, %v2807, %v2803
        %v2809 = vlaneseq
        %v2810 = vshrl.u32 %v2809, 7
        %v2811 = vsub.s32 %v1677, %v2810
        %v2812 = vrot.slane %v1372, %v2811
        %v2813 = vsel %vm1682, %v2812, %v2808
        %v2814 = vlaneseq
        %v2815 = vshrl.u32 %v2814, 7
        %v2816 = vsub.s32 %v1684, %v2815
        %v2817 = vrot.slane %v1373, %v2816
        %v2818 = vsel %vm1689, %v2817, %v2813
        %v2819 = vlaneseq
        %v2820 = vshrl.u32 %v2819, 7
        %v2821 = vsub.s32 %v1691, %v2820
        %v2822 = vrot.slane %v1374, %v2821
        %v2823 = vsel %vm1696, %v2822, %v2818
        %v2824 = vlaneseq
        %v2825 = vshrl.u32 %v2824, 7
        %v2826 = vsub.s32 %v1698, %v2825
        %v2827 = vrot.slane %v1375, %v2826
        %v2828 = vsel %vm1703, %v2827, %v2823
        %v2829 = vlaneseq
        %v2830 = vshrl.u32 %v2829, 7
        %v2831 = vsub.s32 %v1705, %v2830
        %v2832 = vrot.slane %v1376, %v2831
        %v2833 = vsel %vm1710, %v2832, %v2828
        %v2834 = vlaneseq
        %v2835 = vshrl.u32 %v2834, 7
        %v2836 = vsub.s32 %v1712, %v2835
        %v2837 = vrot.slane %v1377, %v2836
        %v2838 = vsel %vm1717, %v2837, %v2833
        %v2839 = vlaneseq
        %v2840 = vshrl.u32 %v2839, 7
        %v2841 = vsub.s32 %v1719, %v2840
        %v2842 = vrot.slane %v1378, %v2841
        %v2843 = vsel %vm1724, %v2842, %v2838
        %v2844 = vlaneseq
        %v2845 = vshrl.u32 %v2844, 7
        %v2846 = vsub.s32 %v1726, %v2845
        %v2847 = vrot.slane %v1379, %v2846
        %v2848 = vsel %vm1731, %v2847, %v2843
        %v2849 = vlaneseq
        %v2850 = vshrl.u32 %v2849, 7
        %v2851 = vsub.s32 %v1733, %v2850
        %v2852 = vrot.slane %v1380, %v2851
        %v2853 = vsel %vm1738, %v2852, %v2848
        %v2854 = vlaneseq
        %v2855 = vshrl.u32 %v2854, 7
        %v2856 = vsub.s32 %v1740, %v2855
        %v2857 = vrot.slane %v1381, %v2856
        %v2858 = vsel %vm1745, %v2857, %v2853
        %v2859 = vlaneseq
        %v2860 = vshrl.u32 %v2859, 7
        %v2861 = vsub.s32 %v1747, %v2860
        %v2862 = vrot.slane %v1382, %v2861
        %v2863 = vsel %vm1752, %v2862, %v2858
        %v2864 = vlaneseq
        %v2865 = vshrl.u32 %v2864, 7
        %v2866 = vsub.s32 %v1754, %v2865
        %v2867 = vrot.slane %v1383, %v2866
        %v2868 = vsel %vm1759, %v2867, %v2863
        %v2869 = vlaneseq
        %v2870 = vshrl.u32 %v2869, 7
        %v2871 = vsub.s32 %v1761, %v2870
        %v2872 = vrot.slane %v1384, %v2871
        %v2873 = vsel %vm1766, %v2872, %v2868
        %v2874 = vlaneseq
        %v2875 = vshrl.u32 %v2874, 7
        %v2876 = vsub.s32 %v1658, %v2875
        %v2877 = vrot.slane %v1385, %v2876
        %v2878 = vlaneseq
        %v2879 = vshrl.u32 %v2878, 7
        %v2880 = vsub.s32 %v1663, %v2879
        %v2881 = vrot.slane %v1386, %v2880
        %v2882 = vsel %vm1668, %v2881, %v2877
        %v2883 = vlaneseq
        %v2884 = vshrl.u32 %v2883, 7
        %v2885 = vsub.s32 %v1670, %v2884
        %v2886 = vrot.slane %v1387, %v2885
        %v2887 = vsel %vm1675, %v2886, %v2882
        %v2888 = vlaneseq
        %v2889 = vshrl.u32 %v2888, 7
        %v2890 = vsub.s32 %v1677, %v2889
        %v2891 = vrot.slane %v1388, %v2890
        %v2892 = vsel %vm1682, %v2891, %v2887
        %v2893 = vlaneseq
        %v2894 = vshrl.u32 %v2893, 7
        %v2895 = vsub.s32 %v1684, %v2894
        %v2896 = vrot.slane %v1389, %v2895
        %v2897 = vsel %vm1689, %v2896, %v2892
        %v2898 = vlaneseq
        %v2899 = vshrl.u32 %v2898, 7
        %v2900 = vsub.s32 %v1691, %v2899
        %v2901 = vrot.slane %v1390, %v2900
        %v2902 = vsel %vm1696, %v2901, %v2897
        %v2903 = vlaneseq
        %v2904 = vshrl.u32 %v2903, 7
        %v2905 = vsub.s32 %v1698, %v2904
        %v2906 = vrot.slane %v1391, %v2905
        %v2907 = vsel %vm1703, %v2906, %v2902
        %v2908 = vlaneseq
        %v2909 = vshrl.u32 %v2908, 7
        %v2910 = vsub.s32 %v1705, %v2909
        %v2911 = vrot.slane %v1392, %v2910
        %v2912 = vsel %vm1710, %v2911, %v2907
        %v2913 = vlaneseq
        %v2914 = vshrl.u32 %v2913, 7
        %v2915 = vsub.s32 %v1712, %v2914
        %v2916 = vrot.slane %v1393, %v2915
        %v2917 = vsel %vm1717, %v2916, %v2912
        %v2918 = vlaneseq
        %v2919 = vshrl.u32 %v2918, 7
        %v2920 = vsub.s32 %v1719, %v2919
        %v2921 = vrot.slane %v1394, %v2920
        %v2922 = vsel %vm1724, %v2921, %v2917
        %v2923 = vlaneseq
        %v2924 = vshrl.u32 %v2923, 7
        %v2925 = vsub.s32 %v1726, %v2924
        %v2926 = vrot.slane %v1395, %v2925
        %v2927 = vsel %vm1731, %v2926, %v2922
        %v2928 = vlaneseq
        %v2929 = vshrl.u32 %v2928, 7
        %v2930 = vsub.s32 %v1733, %v2929
        %v2931 = vrot.slane %v1396, %v2930
        %v2932 = vsel %vm1738, %v2931, %v2927
        %v2933 = vlaneseq
        %v2934 = vshrl.u32 %v2933, 7
        %v2935 = vsub.s32 %v1740, %v2934
        %v2936 = vrot.slane %v1397, %v2935
        %v2937 = vsel %vm1745, %v2936, %v2932
        %v2938 = vlaneseq
        %v2939 = vshrl.u32 %v2938, 7
        %v2940 = vsub.s32 %v1747, %v2939
        %v2941 = vrot.slane %v1398, %v2940
        %v2942 = vsel %vm1752, %v2941, %v2937
        %v2943 = vlaneseq
        %v2944 = vshrl.u32 %v2943, 7
        %v2945 = vsub.s32 %v1754, %v2944
        %v2946 = vrot.slane %v1399, %v2945
        %v2947 = vsel %vm1759, %v2946, %v2942
        %v2948 = vlaneseq
        %v2949 = vshrl.u32 %v2948, 7
        %v2950 = vsub.s32 %v1761, %v2949
        %v2951 = vrot.slane %v1400, %v2950
        %v2952 = vsel %vm1766, %v2951, %v2947
        %vm2953 = vcmask 1041409
        %v2954 = vsel %vm2953, %v1925, %v1767
        %vm2955 = vcmask 1042434
        %v2956 = vsel %vm2955, %v2083, %v2954
        %vm2957 = vcmask 1043459
        %v2958 = vsel %vm2957, %v2241, %v2956
        %vm2959 = vcmask 1044484
        %v2960 = vsel %vm2959, %v2399, %v2958
        %vm2961 = vcmask 1045509
        %v2962 = vsel %vm2961, %v2557, %v2960
        %vm2963 = vcmask 1046534
        %v2964 = vsel %vm2963, %v2715, %v2962
        %vm2965 = vcmask 1047559
        %v2966 = vsel %vm2965, %v2873, %v2964
        %v2967 = vsel %vm2953, %v2004, %v1846
        %v2968 = vsel %vm2955, %v2162, %v2967
        %v2969 = vsel %vm2957, %v2320, %v2968
        %v2970 = vsel %vm2959, %v2478, %v2969
        %v2971 = vsel %vm2961, %v2636, %v2970
        %v2972 = vsel %vm2963, %v2794, %v2971
        %v2973 = vsel %vm2965, %v2952, %v2972
        %2976 = vst [vmem:[%s112] sm:$0xff] %v2966
        %2977 = vst [vmem:[%s112 + $0x8] sm:$0xff] %v2973
        %s2978 = sand.u32 %s49, 1
        %s2979 = scalar_lea.sflag [#allocation3], %s2978
        %s2980 = sand.u32 %s49, 1
        %s2981 = smul.addr %s2980, 16
        %s2982 = scalar_lea.vmem [#allocation2], %s2981
        // Predicated region
        $region25: #{tpu_custom_call.1} parent=23 // pred_check
          %p2983 = pneg %p59
        $region26: #{tpu_custom_call.1} parent=23 // pred_check_branch
          %2985 = sbr.rel (%p2983) target = $region28
        $region27: #{tpu_custom_call.1} parent=23 // pred_region
          %s2987 = ssub.s32 256, 256
          %2988 = vsyncadd %s2979, %s2987
          %s2989 = smul.addr %s15, 2
          %s2990 = smul.addr %s2989, 128
          %s2991 = scalar_lea.hbm %s1, %s2990
          %s2993 = sshll.u32 %s2982, 4
          %s2994 = int_to_ptr.vmem [resolvable:$true] %s2993
          %2996 = dma.vmem_to_hbm [thread:$0]  %s2994, 256, %s2991, %s2979
        $region28: #{tpu_custom_call.1} parent=23 // pred_fallthru
          _
      $region24: #{tpu_custom_call.1} parent=5 // pred_fallthru
        _
      %p2997 = scmp.le.s32.totalorder 2, %s10
      // Predicated region
      $region29: #{tpu_custom_call.1} parent=5 // pred_check
        %p2998 = pneg %p2997
      $region30: #{tpu_custom_call.1} parent=5 // pred_check_branch
        %3000 = sbr.rel (%p2998) target = $region32
      $region31: #{tpu_custom_call.1} parent=5 // pred_region
        %s3001 = ssub.s32 %s10, 2
        // Predicated region
        $region33: #{tpu_custom_call.1} parent=31 // pred_check
          %p3002 = pneg %p65
        $region34: #{tpu_custom_call.1} parent=31 // pred_check_branch
          %3004 = sbr.rel (%p3002) target = $region36
        $region35: #{tpu_custom_call.1} parent=31 // pred_region
          %s3005 = sand.u32 %s50, 1
          %s3006 = scalar_lea.sflag [#allocation3], %s3005
          %s3007 = sand.u32 %s50, 1
          %s3008 = smul.addr %s3007, 16
          %s3009 = scalar_lea.vmem [#allocation2], %s3008
          %3010 = dma.done %s3006, 256
        $region36: #{tpu_custom_call.1} parent=31 // pred_fallthru
          _
      $region32: #{tpu_custom_call.1} parent=5 // pred_fallthru
        _
    $region6: #{tpu_custom_call.1} parent=1 // loop_footer
      %s14 = sadd.s32 1, %s10
    $region7: #{tpu_custom_call.1} parent=1 // loop_footer_branch
      %9 = sbr.rel target = $region3
    $region8: #{tpu_custom_call.1} parent=1 // loop_exit
      _
    %3011 = vsyncpa [#allocation3], 1
    %s3012 = scalar_lea.sflag [#allocation3], 1
    %3013 = vsyncpa %s3012, 1

</llo_original>
